<compile_context>
chip_gen: v7x
topology: tpu7x:2x2x1
jax: 0.10.0
libtpu: 0.0.40
codegen_flags: <defaults>
</compile_context>

<pallas_src>
import functools

import jax
import jax.numpy as jnp
from jax.experimental import pallas as pl
from jax.experimental.pallas import tpu as pltpu

# ------------------------- configuration -------------------------
INPLANES = 4
OUTPLANES = 8
ITERS = 10          # iterations=10 (module default)
PPI = 4             # pixels_per_iter=4 (maxpool kernel & stride)
KS = 3              # depthwise kernel size
NTAP = KS * KS

LANE = 128
_STAGE2_VMEM_BUDGET = 40 << 20   # target working set for stage 2 (bytes)
_VMEM_LIMIT_BYTES = 48 << 20     # scoped-VMEM limit (< v7x 64 MiB physical)


def _round_up(v, m):
    return ((v + m - 1) // m) * m


# ===================== kernel 1: fused convs + sigmoid + maxpool + relu =====
# Per batch the whole pre-stage is a single MXU matmul
#     both = W_both (2*Cout, 9*Cin) @ xcol (9*Cin, 16*Pp)
# where xcol's lane axis is pool-window-major: lane = j*Pp + p with j = pixel
# index inside the 4x4 pooling window and p = window index (Pp lane-aligned).
# The 4x4/stride-4 maxpool is a binary max tree over 16 lane-aligned chunks.
# sigmoid is monotone, so maxdown(sigmoid(z)) == sigmoid(maxdown(z)); relu
# after pool matches the module's maxdown -> relu order exactly.
def _pre_kernel(xcol_ref, w_both_ref, att_out_ref, x_out_ref):
    # xcol_ref : (NTAP*Cin, 16*Pp) f32
    # w_both   : (2*Cout, NTAP*Cin) f32  rows [0:Cout] = fused att weights,
    #                                    rows [Cout:]  = conv1x1 (center tap)
    # att_out, x_out : (Cout, Pp) f32 lane-dense flattened outputs
    Cout, Pp = att_out_ref.shape

    both = jnp.dot(w_both_ref[...], xcol_ref[...],
                   preferred_element_type=jnp.float32)            # (2*Cout, 16*Pp)

    # 4x4/stride-4 maxpool: binary max tree over the 16 contiguous lane chunks.
    chunks = [both[:, j * Pp:(j + 1) * Pp] for j in range(PPI * PPI)]
    while len(chunks) > 1:
        chunks = [jnp.maximum(chunks[i], chunks[i + 1])
                  for i in range(0, len(chunks), 2)]
    pooled = chunks[0]

    att_out_ref[...] = jax.nn.sigmoid(pooled[:Cout, :])   # sigmoid∘maxdown == maxdown∘sigmoid
    x_out_ref[...] = jnp.maximum(pooled[Cout:, :], 0.0)   # relu(maxdown(conv1x1(x)))


# ===================== kernel 2: 10 x (grid_sample * att ; fused 1x1 add) ===
# grid = (N, ITERS, n_col_tiles).  Per grid step we consume one (Pp, TP) bf16
# column tile of the interpolation matrix (streamed by the BlockSpec pipeline)
# and produce the matching column tile of the new x and of the aggregate:
#     x_new[:, col]  = (x_old @ mt[:, col]) * att[:, col]
#     agg[:, col]    = Wa @ agg[:, col] + Wb @ x_new[:, col]
# x_old / x_new / agg live in VMEM scratch across the whole (it, t) sweep.
def _iter_kernel(x0_ref, att_ref, wa_ref, wb_ref, mt_ref, agg_ref,
                 x_cur, x_nxt, agg_sc, *, n_tiles):
    # x0_ref  : (Cout, Pp)       f32   (resident per batch)
    # att_ref : (Cout, TP)       f32   (column tile t)
    # wa, wb  : (Cout, Cout)     f32
    # mt_ref  : (Pp, TP)         bf16  (column tile t, streamed from HBM)
    # agg_ref : (Cout, Pp)       f32   output (written at the final step)
    # x_cur   : (Cout, Pp)       bf16  scratch: current x (matmul LHS)
    # x_nxt   : (n_tiles, Cout, TP) f32 scratch: next x, per column tile
    # agg_sc  : (n_tiles, Cout, TP) f32 scratch: aggregate, per column tile
    it = pl.program_id(1)
    t = pl.program_id(2)
    TP = mt_ref.shape[-1]

    @pl.when(jnp.logical_and(it == 0, t == 0))
    def _init():
        x_cur[...] = x0_ref[...].astype(jnp.bfloat16)
        for tt in range(n_tiles):                       # aggregate = x (static slices)
            agg_sc[tt] = x0_ref[:, tt * TP:(tt + 1) * TP]

    # grid_sample(bilinear) as a bf16 MXU matmul over the column tile, f32 acc.
    x_tile = (jnp.dot(x_cur[...], mt_ref[...],
                      preferred_element_type=jnp.float32)
              * att_ref[...])
    x_nxt[t] = x_tile

    # add(cat([aggregate, x], dim=1)) == Wa @ aggregate + Wb @ x  (no concat copy)
    agg_sc[t] = (jnp.dot(wa_ref[...], agg_sc[t], preferred_element_type=jnp.float32)
                 + jnp.dot(wb_ref[...], x_tile, preferred_element_type=jnp.float32))

    @pl.when(t == n_tiles - 1)
    def _advance():                                     # end of iteration: x <- x_new
        for tt in range(n_tiles):
            x_cur[:, tt * TP:(tt + 1) * TP] = x_nxt[tt].astype(jnp.bfloat16)

    @pl.when(jnp.logical_and(it == ITERS - 1, t == n_tiles - 1))
    def _finalize():
        for tt in range(n_tiles):
            agg_ref[:, tt * TP:(tt + 1) * TP] = agg_sc[tt]


# ------------------------- JAX glue -------------------------
def _im2col_pool_major(x, Pp):
    """(N, Cin, H, W) -> (N, NTAP*Cin, 16*Pp) f32.

    Row  t*Cin + c : input channel c shifted by 3x3 tap t (zero padding=1).
    Lane j*Pp + p  : j = pixel index inside the 4x4 pooling window,
                     p = pooling-window index (row-major over (Hs, Ws)),
                     zero-padded up to Pp (lane-aligned).
    # TODO(synk): build the taps inside kernel 1 (padded input + static slices
    # or pltpu.roll) instead of this 9x im2col + XLA transpose in HBM.
    """
    N, Cin, H, W = x.shape
    Hs, Ws = H // PPI, W // PPI
    P = Hs * Ws
    xp = jnp.pad(x, ((0, 0), (0, 0), (1, 1), (1, 1)))
    shifts = [xp[:, :, dy:dy + H, dx:dx + W]
              for dy in range(KS) for dx in range(KS)]
    xs = jnp.concatenate(shifts, axis=1)                        # (N, 9*Cin, H, W)
    xs = xs.reshape(N, NTAP * Cin, Hs, PPI, Ws, PPI)            # (n, r, ph, jh, pw, jw)
    xs = xs.transpose(0, 1, 3, 5, 2, 4)                         # (n, r, jh, jw, ph, pw)
    xs = xs.reshape(N, NTAP * Cin, PPI * PPI, P)
    if Pp > P:
        xs = jnp.pad(xs, ((0, 0), (0, 0), (0, 0), (0, Pp - P)))
    return xs.reshape(N, NTAP * Cin, PPI * PPI * Pp)


def _fused_pre_weights(params, Cin, Cout):
    """Fold SeparableConv2d (dw3x3 -> pw1x1) and conv1x1 into one (2*Cout, 9*Cin)."""
    w_att = (params["w_pw"][:, None, :] * params["w_dw"].T[None, :, :]
             ).reshape(Cout, NTAP * Cin)                        # column index = t*Cin + c
    ctr = NTAP // 2                                             # center tap (dy=1, dx=1)
    w_conv_full = jnp.zeros((Cout, NTAP * Cin), jnp.float32)
    w_conv_full = w_conv_full.at[:, ctr * Cin:(ctr + 1) * Cin].set(params["w_conv"])
    return jnp.concatenate([w_att, w_conv_full], axis=0)        # (2*Cout, 9*Cin)


def build_interp_matrix_t(grid, Hs, Ws, Pp, dtype=jnp.bfloat16):
    """Bilinear grid_sample (align_corners=True, zeros padding) as a matrix,
    built directly TRANSPOSED and zero-padded to (Pp, Pp):
        out[n, :, p] = sum_q in[n, :, q] * MT[n, q, p].
    Scatter-add construction: no dense one_hot temporaries, no swapaxes."""
    N, Hg, Wg, _ = grid.shape
    P = Hg * Wg
    gx = grid[..., 0].reshape(N, P)
    gy = grid[..., 1].reshape(N, P)
    ix = (gx + 1.0) * 0.5 * (Ws - 1)          # align_corners=True (as in the module)
    iy = (gy + 1.0) * 0.5 * (Hs - 1)
    ix0, iy0 = jnp.floor(ix), jnp.floor(iy)
    wx1, wy1 = ix - ix0, iy - iy0
    wx0, wy0 = 1.0 - wx1, 1.0 - wy1

    n_idx = jnp.broadcast_to(jnp.arange(N)[:, None], (N, P))
    p_idx = jnp.broadcast_to(jnp.arange(P)[None, :], (N, P))
    mt = jnp.zeros((N, Pp, Pp), jnp.float32)
    for xi, yi, w in ((ix0, iy0, wx0 * wy0), (ix0 + 1.0, iy0, wx1 * wy0),
                      (ix0, iy0 + 1.0, wx0 * wy1), (ix0 + 1.0, iy0 + 1.0, wx1 * wy1)):
        valid = (xi >= 0) & (xi <= Ws - 1) & (yi >= 0) & (yi <= Hs - 1)
        q = yi.astype(jnp.int32) * Ws + xi.astype(jnp.int32)
        q = jnp.where(valid, q, 0)
        mt = mt.at[n_idx, q, p_idx].add(jnp.where(valid, w, 0.0))
    return mt.astype(dtype)


def _choose_col_tile(Pp, Cout=OUTPLANES):
    """Width TP of the mt column tile.  The bf16 tile (Pp, TP) is
    double-buffered by the BlockSpec pipeline; x/att/agg residents cost
    ~26*Cout*Pp bytes.  Returns the largest 128-multiple divisor of Pp whose
    double-buffered tile fits the budget -> TP == Pp (fully resident, one fetch
    per batch) whenever possible, column streaming otherwise."""
    resident = 26 * Cout * Pp + (2 << 20)
    avail = max(_STAGE2_VMEM_BUDGET - resident, 2 * 2 * LANE * Pp)
    tp_cap = avail // (2 * 2 * Pp)                   # bf16, double-buffered
    tp_cap = max(LANE, min(Pp, (tp_cap // LANE) * LANE))
    units = Pp // LANE
    best = 1
    for d in range(1, units + 1):
        if units % d == 0 and d * LANE <= tp_cap:
            best = d
    return best * LANE


@jax.jit
def flow_process(x, grid, params):
    """x: (N, Cin, H, W) f32 NCHW; grid: (N, H/PPI, W/PPI, 2) in [-1, 1]."""
    N, Cin, H, W = x.shape
    Hs, Ws = H // PPI, W // PPI
    P = Hs * Ws
    Pp = _round_up(P, LANE)                 # lane-aligned pooled spatial size
    Cout = params["w_conv"].shape[0]

    # ---- stage 1: fused SeparableConv/conv1x1 + sigmoid + maxpool + relu ----
    xcol = _im2col_pool_major(x, Pp)                            # (N, 9*Cin, 16*Pp)
    w_both = _fused_pre_weights(params, Cin, Cout)              # (2*Cout, 9*Cin)

    att_flat, x_flat = pl.pallas_call(
        _pre_kernel,
        out_shape=(jax.ShapeDtypeStruct((N, Cout, Pp), jnp.float32),
                   jax.ShapeDtypeStruct((N, Cout, Pp), jnp.float32)),
        grid=(N,),
        in_specs=[
            pl.BlockSpec((None, NTAP * Cin, PPI * PPI * Pp), lambda n: (n, 0, 0)),
            pl.BlockSpec((2 * Cout, NTAP * Cin), lambda n: (0, 0)),
        ],
        out_specs=(pl.BlockSpec((None, Cout, Pp), lambda n: (n, 0, 0)),
                   pl.BlockSpec((None, Cout, Pp), lambda n: (n, 0, 0))),
        compiler_params=pltpu.CompilerParams(
            dimension_semantics=("parallel",),
            vmem_limit_bytes=_VMEM_LIMIT_BYTES),
    )(xcol, w_both)

    # ---- stage 2: 10 iterations of grid_sample*att + fused aggregation -----
    mt = build_interp_matrix_t(grid, Hs, Ws, Pp, dtype=jnp.bfloat16)  # (N, Pp, Pp)
    wa = params["w_add_a"]
    wb = params["w_add_b"]

    TP = _choose_col_tile(Pp, Cout)
    n_tiles = Pp // TP

    cost = pl.CostEstimate(
        flops=N * ITERS * (2 * Cout * Pp * Pp + 2 * 2 * Cout * Cout * Pp),
        transcendentals=0,
        bytes_accessed=(N * (ITERS if n_tiles > 1 else 1) * 2 * Pp * Pp
                        + N * 4 * 4 * Cout * Pp + 4 * 2 * Cout * Cout))

    agg = pl.pallas_call(
        functools.partial(_iter_kernel, n_tiles=n_tiles),
        out_shape=jax.ShapeDtypeStruct((N, Cout, Pp), jnp.float32),
        grid=(N, ITERS, n_tiles),
        in_specs=[
            pl.BlockSpec((None, Cout, Pp), lambda n, i, t: (n, 0, 0)),   # x0 (resident)
            pl.BlockSpec((None, Cout, TP), lambda n, i, t: (n, 0, t)),   # att tile
            pl.BlockSpec((Cout, Cout), lambda n, i, t: (0, 0)),          # Wa
            pl.BlockSpec((Cout, Cout), lambda n, i, t: (0, 0)),          # Wb
            pl.BlockSpec((None, Pp, TP), lambda n, i, t: (n, 0, t)),     # mt column tile
        ],
        out_specs=pl.BlockSpec((None, Cout, Pp), lambda n, i, t: (n, 0, 0)),
        scratch_shapes=[
            pltpu.VMEM((Cout, Pp), jnp.bfloat16),            # x_cur (matmul LHS)
            pltpu.VMEM((n_tiles, Cout, TP), jnp.float32),    # x_nxt
            pltpu.VMEM((n_tiles, Cout, TP), jnp.float32),    # aggregate
        ],
        compiler_params=pltpu.CompilerParams(
            dimension_semantics=("parallel", "arbitrary", "arbitrary"),
            vmem_limit_bytes=_VMEM_LIMIT_BYTES),
        cost_estimate=cost,
    )(x_flat, att_flat, wa, wb, mt)

    return agg[:, :, :P].reshape(N, Cout, Hs, Ws)


# ------------------------- pure-JAX reference (for verification) ------------
def build_interp_matrix_ref(grid, Hs, Ws):
    """Independent (one_hot based) construction: M[n, p, q]."""
    N, Hg, Wg, _ = grid.shape
    gx, gy = grid[..., 0], grid[..., 1]
    ix = (gx + 1.0) * 0.5 * (Ws - 1)
    iy = (gy + 1.0) * 0.5 * (Hs - 1)
    ix0, iy0 = jnp.floor(ix), jnp.floor(iy)
    ix1, iy1 = ix0 + 1.0, iy0 + 1.0
    wx1, wy1 = ix - ix0, iy - iy0
    wx0, wy0 = 1.0 - wx1, 1.0 - wy1
    Q = Hs * Ws

    def corner(xi, yi, w):
        valid = (xi >= 0) & (xi <= Ws - 1) & (yi >= 0) & (yi <= Hs - 1)
        q = yi.astype(jnp.int32) * Ws + xi.astype(jnp.int32)
        q = jnp.where(valid, q, 0)
        onehot = jax.nn.one_hot(q, Q, dtype=jnp.float32)
        return onehot * (w * valid)[..., None]

    M = (corner(ix0, iy0, wx0 * wy0) + corner(ix1, iy0, wx1 * wy0)
         + corner(ix0, iy1, wx0 * wy1) + corner(ix1, iy1, wx1 * wy1))
    return M.reshape(N, Hg * Wg, Q)


def reference(x, grid, params):
    N, Cin, H, W = x.shape
    Hs, Ws = H // PPI, W // PPI
    w_dw = params["w_dw"].reshape(Cin, KS, KS)
    xp = jnp.pad(x, ((0, 0), (0, 0), (1, 1), (1, 1)))
    dw = jnp.zeros((N, Cin, H, W), jnp.float32)
    for dy in range(KS):
        for dx in range(KS):
            dw = dw + xp[:, :, dy:dy + H, dx:dx + W] * w_dw[None, :, dy, dx, None, None]
    att = jax.nn.sigmoid(jnp.einsum("oc,nchw->nohw", params["w_pw"], dw))
    xc = jnp.einsum("oc,nchw->nohw", params["w_conv"], x)

    def mp(a):
        n, c, h, w = a.shape
        return a.reshape(n, c, h // PPI, PPI, w // PPI, PPI).max(axis=(3, 5))

    att = mp(att)
    xc = jnp.maximum(mp(xc), 0.0)
    M = build_interp_matrix_ref(grid, Hs, Ws).astype(jnp.bfloat16)   # same bf16 choice
    x_flat = xc.reshape(N, -1, Hs * Ws)
    att_flat = att.reshape(N, -1, Hs * Ws)
    agg, xcur = x_flat, x_flat
    for _ in range(ITERS):
        xcur = jnp.einsum("ncq,npq->ncp", xcur.astype(jnp.bfloat16), M,
                          preferred_element_type=jnp.float32) * att_flat
        agg = (jnp.einsum("oc,ncp->nop", params["w_add_a"], agg,
                          preferred_element_type=jnp.float32)
               + jnp.einsum("oc,ncp->nop", params["w_add_b"], xcur,
                            preferred_element_type=jnp.float32))
    return agg.reshape(N, -1, Hs, Ws)


# ------------------------- parameters -------------------------
def init_params(key, Cin=INPLANES, Cout=OUTPLANES):
    k1, k2, k3, k4 = jax.random.split(key, 4)
    w_dw = jax.random.normal(k1, (Cin, KS, KS), jnp.float32) * 0.25
    w_pw = jax.random.normal(k2, (Cout, Cin), jnp.float32) * 0.35
    w_conv = jax.random.normal(k3, (Cout, Cin), jnp.float32) * 0.35
    w_add = jax.random.normal(k4, (Cout, 2 * Cout), jnp.float32) * 0.2
    return dict(
        w_dw=w_dw.reshape(Cin, KS * KS),   # flat tap index = dy*KS + dx
        w_pw=w_pw,
        w_conv=w_conv,
        w_add_a=w_add[:, :Cout],           # applied to `aggregate` (first in concat)
        w_add_b=w_add[:, Cout:],           # applied to `x`
    )


if __name__ == "__main__":
    N, H, W = 2, 16, 16
    key = jax.random.PRNGKey(0)
    kx, kg, kp = jax.random.split(key, 3)
    x = jax.random.normal(kx, (N, INPLANES, H, W), jnp.float32)
    grid = jax.random.uniform(kg, (N, H // PPI, W // PPI, 2), jnp.float32,
                              minval=-1.0, maxval=1.0)
    params = init_params(kp)

    out = jax.block_until_ready(flow_process(x, grid, params))
    ref = jax.block_until_ready(reference(x, grid, params))

    assert out.shape == (N, OUTPLANES, H // PPI, W // PPI)
    assert bool(jnp.all(jnp.isfinite(out)))
    max_err = float(jnp.max(jnp.abs(out - ref)))
    # Tolerance note: both paths use bf16 for the grid_sample matmul (f32
    # accumulation), but the pre-stages differ in accumulation order at the
    # ~1e-6 f32 level; a value straddling a bf16 rounding boundary can turn
    # that into ~1 bf16 ulp (~0.4% rel).  Real layout/weight bugs give O(1).
    if max_err < 3e-2:
        print("KERNEL_OK")
    else:
        print(f"MISMATCH max_abs_err={max_err}")
</pallas_src>

<mosaic_0001>
module attributes {stable_mosaic.version = 11 : i64} {
  func.func private @main(%arg0: i32) attributes {dimension_semantics = [#tpu.dimension_semantics<core_parallel>], iteration_bounds = array<i64: 2>, tpu.core_type = #tpu.core_type<sc_scalar_subcore>, window_params = []} {
    return
  }
}

module attributes {stable_mosaic.version = 11 : i64} {
  func.func private @main(%arg0: i32) attributes {dimension_semantics = [#tpu.dimension_semantics<core_parallel>], iteration_bounds = array<i64: 2>, tpu.core_type = #tpu.core_type<sc_scalar_subcore>, window_params = []} {
    return
  }
}

module attributes {stable_mosaic.version = 11 : i64} {
  func.func @_pre_kernel(%arg0: i32, %arg1: memref<1x36x2048xf32, #tpu.memory_space<vmem>>, %arg2: memref<16x36xf32, #tpu.memory_space<vmem>>, %arg3: memref<1x8x128xf32, #tpu.memory_space<vmem>>, %arg4: memref<1x8x128xf32, #tpu.memory_space<vmem>>) attributes {dimension_semantics = [#tpu.dimension_semantics<parallel>], iteration_bounds = array<i64: 2>, scalar_prefetch = 0 : i64, scratch_operands = 0 : i64, tpu.core_type = #tpu.core_type<tc>, window_params = [{transform_indices = @transform_0, window_bounds = array<i64: 1, 36, 2048>}, {pipeline_mode = #tpu.pipeline_mode<synchronous>, transform_indices = @transform_1, window_bounds = array<i64: 16, 36>}, {transform_indices = @transform_2, window_bounds = array<i64: 1, 8, 128>}, {transform_indices = @transform_3, window_bounds = array<i64: 1, 8, 128>}]} {
    %c0 = arith.constant 0 : index
    %c0_0 = arith.constant 0 : index
    %0 = vector.load %arg2[%c0, %c0_0] : memref<16x36xf32, #tpu.memory_space<vmem>>, vector<16x36xf32>
    %c0_1 = arith.constant 0 : index
    %c0_2 = arith.constant 0 : index
    %c0_3 = arith.constant 0 : index
    %1 = vector.load %arg1[%c0_1, %c0_2, %c0_3] : memref<1x36x2048xf32, #tpu.memory_space<vmem>>, vector<1x36x2048xf32>
    %2 = vector.shape_cast %1 : vector<1x36x2048xf32> to vector<36x2048xf32>
    %cst = arith.constant dense<0.000000e+00> : vector<16x2048xf32>
    %3 = tpu.matmul %0, %2, %cst {dimension_numbers = #tpu.dot_dimension_numbers<[1], [0], [0], [1], [0, 0, 1, 1], [], []>} : vector<16x36xf32>, vector<36x2048xf32>, vector<16x2048xf32> -> vector<16x2048xf32>
    %4 = vector.extract_strided_slice %3 {offsets = [0, 0], sizes = [16, 128], strides = [1, 1]} : vector<16x2048xf32> to vector<16x128xf32>
    %5 = vector.extract_strided_slice %3 {offsets = [0, 128], sizes = [16, 128], strides = [1, 1]} : vector<16x2048xf32> to vector<16x128xf32>
    %6 = vector.extract_strided_slice %3 {offsets = [0, 256], sizes = [16, 128], strides = [1, 1]} : vector<16x2048xf32> to vector<16x128xf32>
    %7 = vector.extract_strided_slice %3 {offsets = [0, 384], sizes = [16, 128], strides = [1, 1]} : vector<16x2048xf32> to vector<16x128xf32>
    %8 = vector.extract_strided_slice %3 {offsets = [0, 512], sizes = [16, 128], strides = [1, 1]} : vector<16x2048xf32> to vector<16x128xf32>
    %9 = vector.extract_strided_slice %3 {offsets = [0, 640], sizes = [16, 128], strides = [1, 1]} : vector<16x2048xf32> to vector<16x128xf32>
    %10 = vector.extract_strided_slice %3 {offsets = [0, 768], sizes = [16, 128], strides = [1, 1]} : vector<16x2048xf32> to vector<16x128xf32>
    %11 = vector.extract_strided_slice %3 {offsets = [0, 896], sizes = [16, 128], strides = [1, 1]} : vector<16x2048xf32> to vector<16x128xf32>
    %12 = vector.extract_strided_slice %3 {offsets = [0, 1024], sizes = [16, 128], strides = [1, 1]} : vector<16x2048xf32> to vector<16x128xf32>
    %13 = vector.extract_strided_slice %3 {offsets = [0, 1152], sizes = [16, 128], strides = [1, 1]} : vector<16x2048xf32> to vector<16x128xf32>
    %14 = vector.extract_strided_slice %3 {offsets = [0, 1280], sizes = [16, 128], strides = [1, 1]} : vector<16x2048xf32> to vector<16x128xf32>
    %15 = vector.extract_strided_slice %3 {offsets = [0, 1408], sizes = [16, 128], strides = [1, 1]} : vector<16x2048xf32> to vector<16x128xf32>
    %16 = vector.extract_strided_slice %3 {offsets = [0, 1536], sizes = [16, 128], strides = [1, 1]} : vector<16x2048xf32> to vector<16x128xf32>
    %17 = vector.extract_strided_slice %3 {offsets = [0, 1664], sizes = [16, 128], strides = [1, 1]} : vector<16x2048xf32> to vector<16x128xf32>
    %18 = vector.extract_strided_slice %3 {offsets = [0, 1792], sizes = [16, 128], strides = [1, 1]} : vector<16x2048xf32> to vector<16x128xf32>
    %19 = vector.extract_strided_slice %3 {offsets = [0, 1920], sizes = [16, 128], strides = [1, 1]} : vector<16x2048xf32> to vector<16x128xf32>
    %20 = arith.maximumf %4, %5 : vector<16x128xf32>
    %21 = arith.maximumf %6, %7 : vector<16x128xf32>
    %22 = arith.maximumf %8, %9 : vector<16x128xf32>
    %23 = arith.maximumf %10, %11 : vector<16x128xf32>
    %24 = arith.maximumf %12, %13 : vector<16x128xf32>
    %25 = arith.maximumf %14, %15 : vector<16x128xf32>
    %26 = arith.maximumf %16, %17 : vector<16x128xf32>
    %27 = arith.maximumf %18, %19 : vector<16x128xf32>
    %28 = arith.maximumf %20, %21 : vector<16x128xf32>
    %29 = arith.maximumf %22, %23 : vector<16x128xf32>
    %30 = arith.maximumf %24, %25 : vector<16x128xf32>
    %31 = arith.maximumf %26, %27 : vector<16x128xf32>
    %32 = arith.maximumf %28, %29 : vector<16x128xf32>
    %33 = arith.maximumf %30, %31 : vector<16x128xf32>
    %34 = arith.maximumf %32, %33 : vector<16x128xf32>
    %35 = vector.extract_strided_slice %34 {offsets = [0, 0], sizes = [8, 128], strides = [1, 1]} : vector<16x128xf32> to vector<8x128xf32>
    %36 = arith.negf %35 : vector<8x128xf32>
    %37 = math.exp %36 : vector<8x128xf32>
    %cst_4 = arith.constant 1.000000e+00 : f32
    %38 = vector.broadcast %cst_4 : f32 to vector<8x128xf32>
    %39 = arith.addf %38, %37 : vector<8x128xf32>
    %40 = arith.divf %38, %39 : vector<8x128xf32>
    %c0_5 = arith.constant 0 : index
    %c0_6 = arith.constant 0 : index
    %c0_7 = arith.constant 0 : index
    %41 = vector.load %arg3[%c0_5, %c0_6, %c0_7] : memref<1x8x128xf32, #tpu.memory_space<vmem>>, vector<1x8x128xf32>
    %42 = vector.shape_cast %41 : vector<1x8x128xf32> to vector<8x128xf32>
    %43 = vector.shape_cast %40 : vector<8x128xf32> to vector<1x8x128xf32>
    tpu.vector_store %arg3[%c0_5, %c0_6, %c0_7], %43 {strides = array<i32>} : memref<1x8x128xf32, #tpu.memory_space<vmem>>, vector<1x8x128xf32>,
    %44 = vector.extract_strided_slice %34 {offsets = [8, 0], sizes = [8, 128], strides = [1, 1]} : vector<16x128xf32> to vector<8x128xf32>
    %cst_8 = arith.constant 0.000000e+00 : f32
    %45 = vector.broadcast %cst_8 : f32 to vector<8x128xf32>
    %46 = arith.maximumf %44, %45 : vector<8x128xf32>
    %c0_9 = arith.constant 0 : index
    %c0_10 = arith.constant 0 : index
    %c0_11 = arith.constant 0 : index
    %47 = vector.load %arg4[%c0_9, %c0_10, %c0_11] : memref<1x8x128xf32, #tpu.memory_space<vmem>>, vector<1x8x128xf32>
    %48 = vector.shape_cast %47 : vector<1x8x128xf32> to vector<8x128xf32>
    %49 = vector.shape_cast %46 : vector<8x128xf32> to vector<1x8x128xf32>
    tpu.vector_store %arg4[%c0_9, %c0_10, %c0_11], %49 {strides = array<i32>} : memref<1x8x128xf32, #tpu.memory_space<vmem>>, vector<1x8x128xf32>,
    return
  }
  func.func @transform_0(%arg0: i32) -> (i32, i32, i32) {
    %c0_i32 = arith.constant 0 : i32
    %c0_i32_0 = arith.constant 0 : i32
    %c0_i32_1 = arith.constant 0 : i32
    return %arg0, %c0_i32, %c0_i32_0 : i32, i32, i32
  }
  func.func @transform_1(%arg0: i32) -> (i32, i32) {
    %c0_i32 = arith.constant 0 : i32
    %c0_i32_0 = arith.constant 0 : i32
    %c0_i32_1 = arith.constant 0 : i32
    return %c0_i32, %c0_i32_0 : i32, i32
  }
  func.func @transform_2(%arg0: i32) -> (i32, i32, i32) {
    %c0_i32 = arith.constant 0 : i32
    %c0_i32_0 = arith.constant 0 : i32
    %c0_i32_1 = arith.constant 0 : i32
    return %arg0, %c0_i32, %c0_i32_0 : i32, i32, i32
  }
  func.func @transform_3(%arg0: i32) -> (i32, i32, i32) {
    %c0_i32 = arith.constant 0 : i32
    %c0_i32_0 = arith.constant 0 : i32
    %c0_i32_1 = arith.constant 0 : i32
    return %arg0, %c0_i32, %c0_i32_0 : i32, i32, i32
  }
}

module attributes {stable_mosaic.version = 11 : i64} {
  func.func @_iter_kernel(%arg0: i32, %arg1: i32, %arg2: i32, %arg3: memref<1x8x128xf32, #tpu.memory_space<vmem>>, %arg4: memref<1x8x128xf32, #tpu.memory_space<vmem>>, %arg5: memref<8x8xf32, #tpu.memory_space<vmem>>, %arg6: memref<8x8xf32, #tpu.memory_space<vmem>>, %arg7: memref<1x128x128xbf16, #tpu.memory_space<vmem>>, %arg8: memref<1x8x128xf32, #tpu.memory_space<vmem>>, %arg9: memref<8x128xbf16, #tpu.memory_space<vmem>>, %arg10: memref<1x8x128xf32, #tpu.memory_space<vmem>>, %arg11: memref<1x8x128xf32, #tpu.memory_space<vmem>>) attributes {dimension_semantics = [#tpu.dimension_semantics<parallel>, #tpu.dimension_semantics<arbitrary>, #tpu.dimension_semantics<arbitrary>], iteration_bounds = array<i64: 2, 10, 1>, scalar_prefetch = 0 : i64, scratch_operands = 3 : i64, tpu.core_type = #tpu.core_type<tc>, window_params = [{transform_indices = @transform_0, window_bounds = array<i64: 1, 8, 128>}, {transform_indices = @transform_1, window_bounds = array<i64: 1, 8, 128>}, {pipeline_mode = #tpu.pipeline_mode<synchronous>, transform_indices = @transform_2, window_bounds = array<i64: 8, 8>}, {pipeline_mode = #tpu.pipeline_mode<synchronous>, transform_indices = @transform_3, window_bounds = array<i64: 8, 8>}, {transform_indices = @transform_4, window_bounds = array<i64: 1, 128, 128>}, {transform_indices = @transform_5, window_bounds = array<i64: 1, 8, 128>}]} {
    %c0_i32 = arith.constant 0 : i32
    %0 = arith.cmpi eq, %arg1, %c0_i32 : i32
    %c0_i32_0 = arith.constant 0 : i32
    %1 = arith.cmpi eq, %arg2, %c0_i32_0 : i32
    %2 = arith.andi %0, %1 : i1
    %3 = arith.extui %2 : i1 to i32
    %c0_i32_1 = arith.constant 0 : i32
    %4 = arith.cmpi ne, %3, %c0_i32_1 : i32
    scf.if %4 {
      %c0_25 = arith.constant 0 : index
      %c0_26 = arith.constant 0 : index
      %c0_27 = arith.constant 0 : index
      %36 = vector.load %arg3[%c0_25, %c0_26, %c0_27] : memref<1x8x128xf32, #tpu.memory_space<vmem>>, vector<1x8x128xf32>
      %37 = vector.shape_cast %36 : vector<1x8x128xf32> to vector<8x128xf32>
      %38 = arith.truncf %37 : vector<8x128xf32> to vector<8x128xbf16>
      %c0_28 = arith.constant 0 : index
      %c0_29 = arith.constant 0 : index
      %39 = vector.load %arg9[%c0_28, %c0_29] : memref<8x128xbf16, #tpu.memory_space<vmem>>, vector<8x128xbf16>
      tpu.vector_store %arg9[%c0_28, %c0_29], %38 {strides = array<i32>} : memref<8x128xbf16, #tpu.memory_space<vmem>>, vector<8x128xbf16>,
      %c0_30 = arith.constant 0 : index
      %c0_31 = arith.constant 0 : index
      %c0_32 = arith.constant 0 : index
      %40 = vector.load %arg3[%c0_30, %c0_31, %c0_32] : memref<1x8x128xf32, #tpu.memory_space<vmem>>, vector<1x8x128xf32>
      %41 = vector.shape_cast %40 : vector<1x8x128xf32> to vector<8x128xf32>
      %c0_33 = arith.constant 0 : index
      %c0_34 = arith.constant 0 : index
      %c0_35 = arith.constant 0 : index
      %42 = vector.load %arg11[%c0_33, %c0_34, %c0_35] : memref<1x8x128xf32, #tpu.memory_space<vmem>>, vector<1x8x128xf32>
      %43 = vector.shape_cast %42 : vector<1x8x128xf32> to vector<8x128xf32>
      %44 = vector.shape_cast %41 : vector<8x128xf32> to vector<1x8x128xf32>
      tpu.vector_store %arg11[%c0_33, %c0_34, %c0_35], %44 {strides = array<i32>} : memref<1x8x128xf32, #tpu.memory_space<vmem>>, vector<1x8x128xf32>,
    } else {
    }
    %c0 = arith.constant 0 : index
    %c0_2 = arith.constant 0 : index
    %5 = vector.load %arg9[%c0, %c0_2] : memref<8x128xbf16, #tpu.memory_space<vmem>>, vector<8x128xbf16>
    %c0_3 = arith.constant 0 : index
    %c0_4 = arith.constant 0 : index
    %c0_5 = arith.constant 0 : index
    %6 = vector.load %arg7[%c0_3, %c0_4, %c0_5] : memref<1x128x128xbf16, #tpu.memory_space<vmem>>, vector<1x128x128xbf16>
    %7 = vector.shape_cast %6 : vector<1x128x128xbf16> to vector<128x128xbf16>
    %cst = arith.constant dense<0.000000e+00> : vector<8x128xf32>
    %8 = tpu.matmul %5, %7, %cst {dimension_numbers = #tpu.dot_dimension_numbers<[1], [0], [0], [1], [0, 0, 1, 1], [], []>} : vector<8x128xbf16>, vector<128x128xbf16>, vector<8x128xf32> -> vector<8x128xf32>
    %c0_6 = arith.constant 0 : index
    %c0_7 = arith.constant 0 : index
    %c0_8 = arith.constant 0 : index
    %9 = vector.load %arg4[%c0_6, %c0_7, %c0_8] : memref<1x8x128xf32, #tpu.memory_space<vmem>>, vector<1x8x128xf32>
    %10 = vector.shape_cast %9 : vector<1x8x128xf32> to vector<8x128xf32>
    %11 = arith.mulf %8, %10 : vector<8x128xf32>
    %12 = arith.index_cast %arg2 : i32 to index
    %c0_9 = arith.constant 0 : index
    %c0_10 = arith.constant 0 : index
    %13 = vector.load %arg10[%12, %c0_9, %c0_10] : memref<1x8x128xf32, #tpu.memory_space<vmem>>, vector<1x8x128xf32>
    %14 = vector.shape_cast %13 : vector<1x8x128xf32> to vector<8x128xf32>
    %15 = vector.shape_cast %11 : vector<8x128xf32> to vector<1x8x128xf32>
    tpu.vector_store %arg10[%12, %c0_9, %c0_10], %15 {strides = array<i32>} : memref<1x8x128xf32, #tpu.memory_space<vmem>>, vector<1x8x128xf32>,
    %c0_11 = arith.constant 0 : index
    %c0_12 = arith.constant 0 : index
    %16 = vector.load %arg5[%c0_11, %c0_12] : memref<8x8xf32, #tpu.memory_space<vmem>>, vector<8x8xf32>
    %17 = arith.index_cast %arg2 : i32 to index
    %c0_13 = arith.constant 0 : index
    %c0_14 = arith.constant 0 : index
    %18 = vector.load %arg11[%17, %c0_13, %c0_14] : memref<1x8x128xf32, #tpu.memory_space<vmem>>, vector<1x8x128xf32>
    %19 = vector.shape_cast %18 : vector<1x8x128xf32> to vector<8x128xf32>
    %cst_15 = arith.constant dense<0.000000e+00> : vector<8x128xf32>
    %20 = tpu.matmul %16, %19, %cst_15 {dimension_numbers = #tpu.dot_dimension_numbers<[1], [0], [0], [1], [0, 0, 1, 1], [], []>} : vector<8x8xf32>, vector<8x128xf32>, vector<8x128xf32> -> vector<8x128xf32>
    %c0_16 = arith.constant 0 : index
    %c0_17 = arith.constant 0 : index
    %21 = vector.load %arg6[%c0_16, %c0_17] : memref<8x8xf32, #tpu.memory_space<vmem>>, vector<8x8xf32>
    %cst_18 = arith.constant dense<0.000000e+00> : vector<8x128xf32>
    %22 = tpu.matmul %21, %11, %cst_18 {dimension_numbers = #tpu.dot_dimension_numbers<[1], [0], [0], [1], [0, 0, 1, 1], [], []>} : vector<8x8xf32>, vector<8x128xf32>, vector<8x128xf32> -> vector<8x128xf32>
    %23 = arith.addf %20, %22 : vector<8x128xf32>
    %24 = arith.index_cast %arg2 : i32 to index
    %c0_19 = arith.constant 0 : index
    %c0_20 = arith.constant 0 : index
    %25 = vector.load %arg11[%24, %c0_19, %c0_20] : memref<1x8x128xf32, #tpu.memory_space<vmem>>, vector<1x8x128xf32>
    %26 = vector.shape_cast %25 : vector<1x8x128xf32> to vector<8x128xf32>
    %27 = vector.shape_cast %23 : vector<8x128xf32> to vector<1x8x128xf32>
    tpu.vector_store %arg11[%24, %c0_19, %c0_20], %27 {strides = array<i32>} : memref<1x8x128xf32, #tpu.memory_space<vmem>>, vector<1x8x128xf32>,
    %c0_i32_21 = arith.constant 0 : i32
    %28 = arith.cmpi eq, %arg2, %c0_i32_21 : i32
    %29 = arith.extui %28 : i1 to i32
    %c0_i32_22 = arith.constant 0 : i32
    %30 = arith.cmpi ne, %29, %c0_i32_22 : i32
    scf.if %30 {
      %c0_25 = arith.constant 0 : index
      %c0_26 = arith.constant 0 : index
      %c0_27 = arith.constant 0 : index
      %36 = vector.load %arg10[%c0_25, %c0_26, %c0_27] : memref<1x8x128xf32, #tpu.memory_space<vmem>>, vector<1x8x128xf32>
      %37 = vector.shape_cast %36 : vector<1x8x128xf32> to vector<8x128xf32>
      %38 = arith.truncf %37 : vector<8x128xf32> to vector<8x128xbf16>
      %c0_28 = arith.constant 0 : index
      %c0_29 = arith.constant 0 : index
      %39 = vector.load %arg9[%c0_28, %c0_29] : memref<8x128xbf16, #tpu.memory_space<vmem>>, vector<8x128xbf16>
      tpu.vector_store %arg9[%c0_28, %c0_29], %38 {strides = array<i32>} : memref<8x128xbf16, #tpu.memory_space<vmem>>, vector<8x128xbf16>,
    } else {
    }
    %c9_i32 = arith.constant 9 : i32
    %31 = arith.cmpi eq, %arg1, %c9_i32 : i32
    %c0_i32_23 = arith.constant 0 : i32
    %32 = arith.cmpi eq, %arg2, %c0_i32_23 : i32
    %33 = arith.andi %31, %32 : i1
    %34 = arith.extui %33 : i1 to i32
    %c0_i32_24 = arith.constant 0 : i32
    %35 = arith.cmpi ne, %34, %c0_i32_24 : i32
    scf.if %35 {
      %c0_25 = arith.constant 0 : index
      %c0_26 = arith.constant 0 : index
      %c0_27 = arith.constant 0 : index
      %36 = vector.load %arg11[%c0_25, %c0_26, %c0_27] : memref<1x8x128xf32, #tpu.memory_space<vmem>>, vector<1x8x128xf32>
      %37 = vector.shape_cast %36 : vector<1x8x128xf32> to vector<8x128xf32>
      %c0_28 = arith.constant 0 : index
      %c0_29 = arith.constant 0 : index
      %c0_30 = arith.constant 0 : index
      %38 = vector.load %arg8[%c0_28, %c0_29, %c0_30] : memref<1x8x128xf32, #tpu.memory_space<vmem>>, vector<1x8x128xf32>
      %39 = vector.shape_cast %38 : vector<1x8x128xf32> to vector<8x128xf32>
      %40 = vector.shape_cast %37 : vector<8x128xf32> to vector<1x8x128xf32>
      tpu.vector_store %arg8[%c0_28, %c0_29, %c0_30], %40 {strides = array<i32>} : memref<1x8x128xf32, #tpu.memory_space<vmem>>, vector<1x8x128xf32>,
    } else {
    }
    return
  }
  func.func @transform_0(%arg0: i32, %arg1: i32, %arg2: i32) -> (i32, i32, i32) {
    %c0_i32 = arith.constant 0 : i32
    %c0_i32_0 = arith.constant 0 : i32
    %c0_i32_1 = arith.constant 0 : i32
    return %arg0, %c0_i32, %c0_i32_0 : i32, i32, i32
  }
  func.func @transform_1(%arg0: i32, %arg1: i32, %arg2: i32) -> (i32, i32, i32) {
    %c0_i32 = arith.constant 0 : i32
    %c0_i32_0 = arith.constant 0 : i32
    return %arg0, %c0_i32, %arg2 : i32, i32, i32
  }
  func.func @transform_2(%arg0: i32, %arg1: i32, %arg2: i32) -> (i32, i32) {
    %c0_i32 = arith.constant 0 : i32
    %c0_i32_0 = arith.constant 0 : i32
    %c0_i32_1 = arith.constant 0 : i32
    return %c0_i32, %c0_i32_0 : i32, i32
  }
  func.func @transform_3(%arg0: i32, %arg1: i32, %arg2: i32) -> (i32, i32) {
    %c0_i32 = arith.constant 0 : i32
    %c0_i32_0 = arith.constant 0 : i32
    %c0_i32_1 = arith.constant 0 : i32
    return %c0_i32, %c0_i32_0 : i32, i32
  }
  func.func @transform_4(%arg0: i32, %arg1: i32, %arg2: i32) -> (i32, i32, i32) {
    %c0_i32 = arith.constant 0 : i32
    %c0_i32_0 = arith.constant 0 : i32
    return %arg0, %c0_i32, %arg2 : i32, i32, i32
  }
  func.func @transform_5(%arg0: i32, %arg1: i32, %arg2: i32) -> (i32, i32, i32) {
    %c0_i32 = arith.constant 0 : i32
    %c0_i32_0 = arith.constant 0 : i32
    %c0_i32_1 = arith.constant 0 : i32
    return %arg0, %c0_i32, %c0_i32_0 : i32, i32, i32
  }
}

</mosaic_0001>

<llo_original>
// kernel: flow_process.3
$region0: #{flow_process.3}
  #allocation0 [shape = 'u32[]', space=smem, size = 0x4, offset = 0x4, fixed_abs, tag = 'smem constant byte address 0x4 - core index']
  #allocation1 [shape = 'u32[144,128]{1,0:T(1,128)}', space=vmem, size = 0x12000, scoped, tag = 'internal scratch']
  #allocation2 [shape = 'bf16[8,128]{1,0:T(8,128)(2,1)}', space=vmem, size = 0x800, scoped, tag = 'scratch operand']
  #allocation3 [shape = 'f32[1,8,128]{2,1,0:T(8,128)}', space=vmem, size = 0x1000, scoped, tag = 'scratch operand']
  #allocation4 [shape = 'f32[1,8,128]{2,1,0:T(8,128)}', space=vmem, size = 0x1000, scoped, tag = 'scratch operand']
  %s0 = inlined_call_operand.vmem [shape: f32[2,8,128], index: 0, kind: input, shape index: {}]
  %s1 = inlined_call_operand.vmem [shape: f32[2,8,128], index: 1, kind: input, shape index: {}]
  %s2 = inlined_call_operand.vmem [shape: f32[8,8], index: 2, kind: input, shape index: {}]
  %s3 = inlined_call_operand.vmem [shape: f32[8,8], index: 3, kind: input, shape index: {}]
  %s4 = inlined_call_operand.vmem [shape: bf16[2,128,128], index: 4, kind: input, shape index: {}]
  %s5 = inlined_call_operand.vmem [shape: f32[2,8,128], index: 5, kind: output, shape index: {}]
  %s6 = sld [smem:[#allocation0]]
  $region65: #{flow_process.3} parent=0
    _
  %s8 = ssub.s32 1, %s6
  %s9 = scalar_select 0, %s8, %s6
  loop: start=0, step=1, limit=22
  $region2: #{flow_process.3} parent=0 // loop_pre_header
    _
  $region3: #{flow_process.3} parent=0 // loop_header
    %s11 = sphi 0, %s15
    %p12 = scmp.ge.s32.totalorder %s11, 22
    %s18 = sphi 0, %s37
    %s19 = sphi 0, %s33
    %s20 = sphi 0, %s29
    %s21 = sphi 0, %s18
    %s22 = sphi 0, %s19
    %s23 = sphi 0, %s20
    %s24 = sphi 0, %s21
    %s25 = sphi 0, %s22
    %s26 = sphi 0, %s23
    %s40 = sphi 0, %s42
    %s43 = sphi 0, %s40
    %s44 = sphi 0, %s43
    %s60 = sphi 0, %s44
    %s68 = sphi 0, %s70
    %s71 = sphi 0, %s68
    %s72 = sphi 0, %s71
    %s88 = sphi 0, %s72
    %s92 = sphi 0, %s92
    %s94 = sphi 0, %s92
    %s95 = sphi 0, %s94
    %s109 = sphi 0, %s95
    %s113 = sphi 0, %s113
    %s115 = sphi 0, %s113
    %s116 = sphi 0, %s115
    %s130 = sphi 0, %s116
    %s138 = sphi 0, %s140
    %s141 = sphi 0, %s138
    %s142 = sphi 0, %s141
    %s158 = sphi 0, %s142
    %s164 = sphi 0, %s166
    %s167 = sphi 0, %s164
    %s168 = sphi 0, %s167
    %s184 = sphi 0, %s168
  $region4: #{flow_process.3} parent=0 // loop_header_branch
    %14 = sbr.rel (%p12) target = $region8
  $region5: #{flow_process.3} parent=0 // loop_body
    %s16 = ssub.s32 %s11, 1
    %s17 = ssub.s32 %s11, 2
    %s27 = sadd.s32 1, %s20
    %p28 = scmp.ge.s32.totalorder %s27, 1
    %s29 = scalar_select %p28, 0, %s27
    %s30 = sadd.s32 1, %s19
    %s31 = scalar_select %p28, %s30, %s19
    %p32 = scmp.ge.s32.totalorder %s31, 10
    %s33 = scalar_select %p32, 0, %s31
    %s34 = sadd.s32 1, %s18
    %s35 = scalar_select %p32, %s34, %s18
    %p36 = scmp.ge.s32.totalorder %s35, 2
    %s37 = scalar_select %p36, 0, %s35
    %s38 = ssub.s32 %s18, %s37
    %p39 = scmp.eq.s32.totalorder %s38, 0
    %s41 = sadd.s32 %s40, 1
    %s42 = scalar_select %p39, %s40, %s41
    %p45 = pneg %p39
    %p46 = scmp.eq.s32.totalorder %s11, 19
    %p47 = por %p45, %p46
    %p48 = scmp.ne.s32.totalorder %s40, %s43
    %p49 = scmp.eq.s32.totalorder %s11, 0
    %p50 = por %p48, %p49
    %p51 = scmp.ne.s32.totalorder %s40, %s43
    %p52 = scmp.eq.s32.totalorder %s16, 19
    %p53 = por %p51, %p52
    %p54 = scmp.ne.s32.totalorder %s43, %s44
    %p55 = scmp.eq.s32.totalorder %s16, 0
    %p56 = por %p54, %p55
    %p57 = scmp.ne.s32.totalorder %s43, %s44
    %p58 = scmp.eq.s32.totalorder %s17, 19
    %p59 = por %p57, %p58
    %p61 = scmp.ne.s32.totalorder %s44, %s60
    %p62 = scmp.eq.s32.totalorder %s17, 0
    %p63 = por %p61, %p62
    %s64 = ssub.s32 %s18, %s37
    %s65 = ssub.s32 %s20, %s29
    %s66 = sor.u32 %s64, %s65
    %p67 = scmp.eq.s32.totalorder %s66, 0
    %s69 = sadd.s32 %s68, 1
    %s70 = scalar_select %p67, %s68, %s69
    %p73 = pneg %p67
    %p74 = scmp.eq.s32.totalorder %s11, 19
    %p75 = por %p73, %p74
    %p76 = scmp.ne.s32.totalorder %s68, %s71
    %p77 = scmp.eq.s32.totalorder %s11, 0
    %p78 = por %p76, %p77
    %p79 = scmp.ne.s32.totalorder %s68, %s71
    %p80 = scmp.eq.s32.totalorder %s16, 19
    %p81 = por %p79, %p80
    %p82 = scmp.ne.s32.totalorder %s71, %s72
    %p83 = scmp.eq.s32.totalorder %s16, 0
    %p84 = por %p82, %p83
    %p85 = scmp.ne.s32.totalorder %s71, %s72
    %p86 = scmp.eq.s32.totalorder %s17, 19
    %p87 = por %p85, %p86
    %p89 = scmp.ne.s32.totalorder %s72, %s88
    %p90 = scmp.eq.s32.totalorder %s17, 0
    %p91 = por %p89, %p90
    %s93 = sadd.s32 %s92, 1
    %p96 = scmp.eq.s32.totalorder %s11, 19
    %p97 = scmp.ne.s32.totalorder %s92, %s94
    %p98 = scmp.eq.s32.totalorder %s11, 0
    %p99 = por %p97, %p98
    %p100 = scmp.ne.s32.totalorder %s92, %s94
    %p101 = scmp.eq.s32.totalorder %s16, 19
    %p102 = por %p100, %p101
    %p103 = scmp.ne.s32.totalorder %s94, %s95
    %p104 = scmp.eq.s32.totalorder %s16, 0
    %p105 = por %p103, %p104
    %p106 = scmp.ne.s32.totalorder %s94, %s95
    %p107 = scmp.eq.s32.totalorder %s17, 19
    %p108 = por %p106, %p107
    %p110 = scmp.ne.s32.totalorder %s95, %s109
    %p111 = scmp.eq.s32.totalorder %s17, 0
    %p112 = por %p110, %p111
    %s114 = sadd.s32 %s113, 1
    %p117 = scmp.eq.s32.totalorder %s11, 19
    %p118 = scmp.ne.s32.totalorder %s113, %s115
    %p119 = scmp.eq.s32.totalorder %s11, 0
    %p120 = por %p118, %p119
    %p121 = scmp.ne.s32.totalorder %s113, %s115
    %p122 = scmp.eq.s32.totalorder %s16, 19
    %p123 = por %p121, %p122
    %p124 = scmp.ne.s32.totalorder %s115, %s116
    %p125 = scmp.eq.s32.totalorder %s16, 0
    %p126 = por %p124, %p125
    %p127 = scmp.ne.s32.totalorder %s115, %s116
    %p128 = scmp.eq.s32.totalorder %s17, 19
    %p129 = por %p127, %p128
    %p131 = scmp.ne.s32.totalorder %s116, %s130
    %p132 = scmp.eq.s32.totalorder %s17, 0
    %p133 = por %p131, %p132
    %s134 = ssub.s32 %s18, %s37
    %s135 = ssub.s32 %s20, %s29
    %s136 = sor.u32 %s134, %s135
    %p137 = scmp.eq.s32.totalorder %s136, 0
    %s139 = sadd.s32 %s138, 1
    %s140 = scalar_select %p137, %s138, %s139
    %p143 = pneg %p137
    %p144 = scmp.eq.s32.totalorder %s11, 19
    %p145 = por %p143, %p144
    %p146 = scmp.ne.s32.totalorder %s138, %s141
    %p147 = scmp.eq.s32.totalorder %s11, 0
    %p148 = por %p146, %p147
    %p149 = scmp.ne.s32.totalorder %s138, %s141
    %p150 = scmp.eq.s32.totalorder %s16, 19
    %p151 = por %p149, %p150
    %p152 = scmp.ne.s32.totalorder %s141, %s142
    %p153 = scmp.eq.s32.totalorder %s16, 0
    %p154 = por %p152, %p153
    %p155 = scmp.ne.s32.totalorder %s141, %s142
    %p156 = scmp.eq.s32.totalorder %s17, 19
    %p157 = por %p155, %p156
    %p159 = scmp.ne.s32.totalorder %s142, %s158
    %p160 = scmp.eq.s32.totalorder %s17, 0
    %p161 = por %p159, %p160
    %s162 = ssub.s32 %s18, %s37
    %p163 = scmp.eq.s32.totalorder %s162, 0
    %s165 = sadd.s32 %s164, 1
    %s166 = scalar_select %p163, %s164, %s165
    %p169 = pneg %p163
    %p170 = scmp.eq.s32.totalorder %s11, 19
    %p171 = por %p169, %p170
    %p172 = scmp.ne.s32.totalorder %s164, %s167
    %p173 = scmp.eq.s32.totalorder %s11, 0
    %p174 = por %p172, %p173
    %p175 = scmp.ne.s32.totalorder %s164, %s167
    %p176 = scmp.eq.s32.totalorder %s16, 19
    %p177 = por %p175, %p176
    %p178 = scmp.ne.s32.totalorder %s167, %s168
    %p179 = scmp.eq.s32.totalorder %s16, 0
    %p180 = por %p178, %p179
    %p181 = scmp.ne.s32.totalorder %s167, %s168
    %p182 = scmp.eq.s32.totalorder %s17, 19
    %p183 = por %p181, %p182
    %p185 = scmp.ne.s32.totalorder %s168, %s184
    %p186 = scmp.eq.s32.totalorder %s17, 0
    %p187 = por %p185, %p186
    %p188 = scmp.le.s32.totalorder 1, %s11
    %p189 = scmp.lt.s32.totalorder %s11, 21
    %p190 = pnand %p188, %p189
    %p191 = pneg %p190
    // Predicated region
    $region9: #{flow_process.3} parent=5 // pred_check
      _
    $region10: #{flow_process.3} parent=5 // pred_check_branch
      %193 = sbr.rel (%p190) target = $region12
    $region11: #{flow_process.3} parent=5 // pred_region
      %s194 = ssub.s32 %s11, 1
      // Predicated region
      $region13: #{flow_process.3} parent=11 // pred_check
        %p195 = pneg %p105
      $region14: #{flow_process.3} parent=11 // pred_check_branch
        %197 = sbr.rel (%p195) target = $region16
      $region15: #{flow_process.3} parent=11 // pred_region
        _
      $region16: #{flow_process.3} parent=11 // pred_fallthru
        _
      // Predicated region
      $region17: #{flow_process.3} parent=11 // pred_check
        %p198 = pneg %p126
      $region18: #{flow_process.3} parent=11 // pred_check_branch
        %200 = sbr.rel (%p198) target = $region20
      $region19: #{flow_process.3} parent=11 // pred_region
        _
      $region20: #{flow_process.3} parent=11 // pred_fallthru
        _
    $region12: #{flow_process.3} parent=5 // pred_fallthru
      _
    %p201 = scmp.lt.s32.totalorder %s11, 20
    // Predicated region
    $region21: #{flow_process.3} parent=5 // pred_check
      %p202 = pneg %p201
    $region22: #{flow_process.3} parent=5 // pred_check_branch
      %204 = sbr.rel (%p202) target = $region24
    $region23: #{flow_process.3} parent=5 // pred_region
      // Predicated region
      $region25: #{flow_process.3} parent=23 // pred_check
        %p205 = pneg %p50
      $region26: #{flow_process.3} parent=23 // pred_check_branch
        %207 = sbr.rel (%p205) target = $region28
      $region27: #{flow_process.3} parent=23 // pred_region
        %p208 = scmp.lt.s32.totalorder %s18, 1
        %s209 = scalar_select %p208, %s18, 1
        %s210 = smul.addr %s209, 8
        %s211 = scalar_lea.vmem %s0, %s210
      $region28: #{flow_process.3} parent=23 // pred_fallthru
        _
      // Predicated region
      $region29: #{flow_process.3} parent=23 // pred_check
        %p212 = pneg %p78
      $region30: #{flow_process.3} parent=23 // pred_check_branch
        %214 = sbr.rel (%p212) target = $region32
      $region31: #{flow_process.3} parent=23 // pred_region
        %p215 = scmp.lt.s32.totalorder %s18, 1
        %s216 = scalar_select %p215, %s18, 1
        %p217 = scmp.lt.s32.totalorder %s20, 0
        %s218 = scalar_select %p217, %s20, 0
        %s219 = sadd.s32 %s218, %s216
        %s220 = smul.addr %s219, 8
        %s221 = scalar_lea.vmem %s1, %s220
      $region32: #{flow_process.3} parent=23 // pred_fallthru
        _
      // Predicated region
      $region33: #{flow_process.3} parent=23 // pred_check
        %p222 = pneg %p148
      $region34: #{flow_process.3} parent=23 // pred_check_branch
        %224 = sbr.rel (%p222) target = $region36
      $region35: #{flow_process.3} parent=23 // pred_region
        %p225 = scmp.lt.s32.totalorder %s18, 1
        %s226 = scalar_select %p225, %s18, 1
        %p227 = scmp.lt.s32.totalorder %s20, 0
        %s228 = scalar_select %p227, %s20, 0
        %s229 = smul.addr %s226, 16
        %s230 = sadd.s32 %s228, %s229
        %s231 = smul.addr %s230, 4
        %s232 = scalar_lea.vmem %s4, %s231
      $region36: #{flow_process.3} parent=23 // pred_fallthru
        _
    $region24: #{flow_process.3} parent=5 // pred_fallthru
      _
    %p233 = scmp.le.s32.totalorder 1, %s11
    %p234 = scmp.lt.s32.totalorder %s11, 21
    %p235 = pnand %p233, %p234
    %p236 = pneg %p235
    // Predicated region
    $region37: #{flow_process.3} parent=5 // pred_check
      _
    $region38: #{flow_process.3} parent=5 // pred_check_branch
      %238 = sbr.rel (%p235) target = $region40
    $region39: #{flow_process.3} parent=5 // pred_region
      %s239 = ssub.s32 %s11, 1
      %p240 = scmp.lt.s32.totalorder %s21, 1
      %s241 = scalar_select %p240, %s21, 1
      %s242 = smul.addr %s241, 8
      %s243 = scalar_lea.vmem %s0, %s242
      %p244 = pneg %p56
      %p245 = pneg %p53
      %p246 = scmp.lt.s32.totalorder %s21, 1
      %s247 = scalar_select %p246, %s21, 1
      %p248 = scmp.lt.s32.totalorder %s23, 0
      %s249 = scalar_select %p248, %s23, 0
      %s250 = sadd.s32 %s249, %s247
      %s251 = smul.addr %s250, 8
      %s252 = scalar_lea.vmem %s1, %s251
      %p253 = pneg %p84
      %p254 = pneg %p81
      %p255 = pneg %p105
      %p256 = pneg %p102
      %p257 = pneg %p126
      %p258 = pneg %p123
      %p259 = scmp.lt.s32.totalorder %s21, 1
      %s260 = scalar_select %p259, %s21, 1
      %p261 = scmp.lt.s32.totalorder %s23, 0
      %s262 = scalar_select %p261, %s23, 0
      %s263 = smul.addr %s260, 16
      %s264 = sadd.s32 %s262, %s263
      %s265 = smul.addr %s264, 4
      %s266 = scalar_lea.vmem %s4, %s265
      %p267 = pneg %p154
      %p268 = pneg %p151
      %p269 = pneg %p180
      %p270 = pneg %p177
      %p271 = scmp.lt.s32.totalorder %s21, 1
      %s272 = scalar_select %p271, %s21, 1
      %s273 = smul.addr %s272, 8
      %s274 = scalar_lea.vmem %s5, %s273
      %p275 = scmp.lt.s32.totalorder %s21, 1
      %s276 = scalar_select %p275, %s21, 1
      %s277 = smul.addr %s276, 8
      %s278 = scalar_lea.vmem %s0, %s277
      %p279 = scmp.lt.s32.totalorder %s21, 1
      %s280 = scalar_select %p279, %s21, 1
      %p281 = scmp.lt.s32.totalorder %s23, 0
      %s282 = scalar_select %p281, %s23, 0
      %s283 = sadd.s32 %s282, %s280
      %s284 = smul.addr %s283, 8
      %s285 = scalar_lea.vmem %s1, %s284
      %p286 = scmp.lt.s32.totalorder %s21, 1
      %s287 = scalar_select %p286, %s21, 1
      %p288 = scmp.lt.s32.totalorder %s23, 0
      %s289 = scalar_select %p288, %s23, 0
      %s290 = smul.addr %s287, 16
      %s291 = sadd.s32 %s289, %s290
      %s292 = smul.addr %s291, 4
      %s293 = scalar_lea.vmem %s4, %s292
      %p294 = scmp.lt.s32.totalorder %s21, 1
      %s295 = scalar_select %p294, %s21, 1
      %s296 = smul.addr %s295, 8
      %s297 = scalar_lea.vmem %s5, %s296
      %p299 = scmp.eq.s32.totalorder %s22, 0
      %p300 = scmp.eq.s32.totalorder %s23, 0
      %p301 = pnand %p299, %p300
      %p302 = pneg %p301
      // Predicated region
      $region41: #{flow_process.3} parent=39 // pred_check
        _
      $region42: #{flow_process.3} parent=39 // pred_check_branch
        %304 = sbr.rel (%p301) target = $region44
      $region43: #{flow_process.3} parent=39 // pred_region
        %v305 = vld [vmem:[%s278] sm:$0xff]
        %v306 = vpack.c.bf16 %v305, %v305
        %307 = vst [vmem:[#allocation2] sm:$0xf] %v306
        %v308 = vld [vmem:[%s278] sm:$0xff]
        %309 = vst [vmem:[#allocation4] sm:$0xff] %v308
      $region44: #{flow_process.3} parent=39 // pred_fallthru
        _
      %v310 = vld [vmem:[#allocation2] sm:$0xf]
      %v311 = vld [vmem:[%s293] sm:$0xf]
      %v312 = vld [vmem:[%s293 + $0x4] sm:$0xf]
      %v313 = vld [vmem:[%s293 + $0x8] sm:$0xf]
      %v314 = vld [vmem:[%s293 + $0xc] sm:$0xf]
      %v315 = vld [vmem:[%s293 + $0x10] sm:$0xf]
      %v316 = vld [vmem:[%s293 + $0x14] sm:$0xf]
      %v317 = vld [vmem:[%s293 + $0x18] sm:$0xf]
      %v318 = vld [vmem:[%s293 + $0x1c] sm:$0xf]
      %v319 = vld [vmem:[%s293 + $0x20] sm:$0xf]
      %v320 = vld [vmem:[%s293 + $0x24] sm:$0xf]
      %v321 = vld [vmem:[%s293 + $0x28] sm:$0xf]
      %v322 = vld [vmem:[%s293 + $0x2c] sm:$0xf]
      %v323 = vld [vmem:[%s293 + $0x30] sm:$0xf]
      %v324 = vld [vmem:[%s293 + $0x34] sm:$0xf]
      %v325 = vld [vmem:[%s293 + $0x38] sm:$0xf]
      %v326 = vld [vmem:[%s293 + $0x3c] sm:$0xf]
      %v343 = vunpack.c.l.b16 %v311
      %v344 = vunpack.c.l.b16 %v312
      %v345 = vunpack.c.l.b16 %v313
      %v346 = vunpack.c.l.b16 %v314
      %v347 = vunpack.c.l.b16 %v315
      %v348 = vunpack.c.l.b16 %v316
      %v349 = vunpack.c.l.b16 %v317
      %v350 = vunpack.c.l.b16 %v318
      %v351 = vunpack.c.l.b16 %v319
      %v352 = vunpack.c.l.b16 %v320
      %v353 = vunpack.c.l.b16 %v321
      %v354 = vunpack.c.l.b16 %v322
      %v355 = vunpack.c.l.b16 %v323
      %v356 = vunpack.c.l.b16 %v324
      %v357 = vunpack.c.l.b16 %v325
      %v358 = vunpack.c.l.b16 %v326
      %v359 = vpack.c.b16 %v344, %v343
      %v360 = vpack.c.b16 %v346, %v345
      %v361 = vpack.c.b16 %v348, %v347
      %v362 = vpack.c.b16 %v350, %v349
      %v363 = vpack.c.b16 %v352, %v351
      %v364 = vpack.c.b16 %v354, %v353
      %v365 = vpack.c.b16 %v356, %v355
      %v366 = vpack.c.b16 %v358, %v357
      %375 = vmatprep.subr.bf16.mxu0 0
      %376 = vmatpush1.bf16.msra.mxu0 %v359
      %377 = vmatprep.subr.bf16.mxu0 0
      %378 = vmatpush1.bf16.msra.mxu0 %v360
      %379 = vmatprep.subr.bf16.mxu0 0
      %380 = vmatpush1.bf16.msra.mxu0 %v361
      %381 = vmatprep.subr.bf16.mxu0 0
      %382 = vmatpush1.bf16.msra.mxu0 %v362
      %383 = vmatprep.subr.bf16.mxu0 0
      %384 = vmatpush1.bf16.msra.mxu0 %v363
      %385 = vmatprep.subr.bf16.mxu0 0
      %386 = vmatpush1.bf16.msra.mxu0 %v364
      %387 = vmatprep.subr.bf16.mxu0 0
      %388 = vmatpush1.bf16.msra.mxu0 %v365
      %389 = vmatprep.subr.bf16.mxu0 0
      %390 = vmatpush1.bf16.msra.mxu0 %v366
      %391 = vmatprep.subr.bf16.mxu0 0
      %392 = vmatpush1.bf16.msra.mxu0 0
      %393 = vmatprep.subr.bf16.mxu0 0
      %394 = vmatpush1.bf16.msra.mxu0 0
      %395 = vmatprep.subr.bf16.mxu0 0
      %396 = vmatpush1.bf16.msra.mxu0 0
      %397 = vmatprep.subr.bf16.mxu0 0
      %398 = vmatpush1.bf16.msra.mxu0 0
      %399 = vmatprep.subr.bf16.mxu0 0
      %400 = vmatpush1.bf16.msra.mxu0 0
      %401 = vmatprep.subr.bf16.mxu0 0
      %402 = vmatpush1.bf16.msra.mxu0 0
      %403 = vmatprep.subr.bf16.mxu0 0
      %404 = vmatpush1.bf16.msra.mxu0 0
      %405 = vmatprep.subr.bf16.mxu0 0
      %406 = vmatpush1.bf16.msra.mxu0 0
      %407 = vmatprep.mubr.bf16.mxu0 0
      %408 = vmatmul.mubr.bf16.gmra.mrb[0].mxu0 %v310
      %v409 = vpop.f32.mrb[0].mxu0
      %v410 = vadd.f32 0.0, %v409
      %v411 = vpop.f32.mrb[0].mxu0
      %v412 = vpop.f32.mrb[0].mxu0
      %v413 = vpop.f32.mrb[0].mxu0
      %414 = vdwg.mxu0
      %v415 = vld [vmem:[%s285] sm:$0xff]
      %v416 = vmul.f32 %v410, %v415
      %s417 = smul.u32 %s23, 8
      %s418 = scalar_lea.vmem [#allocation3], %s417
      %419 = vst [vmem:[%s418] sm:$0xff] %v416
      %v420 = vld [vmem:[%s2] sm:$0xff]
      %s421 = scalar_lea.vmem [#allocation4], %s417
      %v422 = vld [vmem:[%s421] sm:$0xff]
      %v423 = vld [vmem:[%s3] sm:$0xff]
      %vm424 = vcmask 64512
      %v426 = vsel %vm424, %v423, 0
      %428 = vmatprep.subr.mxu0 0.0
      %429 = vmatpush1.msra.mxu0 %v416
      %430 = vmatprep.subr.mxu0 0.0
      %431 = vmatpush1.msra.mxu0 0.0
      %432 = vmatprep.subr.mxu0 0.0
      %433 = vmatpush1.msra.mxu0 0.0
      %434 = vmatprep.subr.mxu0 0.0
      %435 = vmatpush1.msra.mxu0 0.0
      %436 = vmatprep.subr.mxu0 0.0
      %437 = vmatpush1.msra.mxu0 0.0
      %438 = vmatprep.subr.mxu0 0.0
      %439 = vmatpush1.msra.mxu0 0.0
      %440 = vmatprep.subr.mxu0 0.0
      %441 = vmatpush1.msra.mxu0 0.0
      %442 = vmatprep.subr.mxu0 0.0
      %443 = vmatpush1.msra.mxu0 0.0
      %444 = vmatprep.subr.mxu0 0.0
      %445 = vmatpush1.msra.mxu0 0.0
      %446 = vmatprep.subr.mxu0 0.0
      %447 = vmatpush1.msra.mxu0 0.0
      %448 = vmatprep.subr.mxu0 0.0
      %449 = vmatpush1.msra.mxu0 0.0
      %450 = vmatprep.subr.mxu0 0.0
      %451 = vmatpush1.msra.mxu0 0.0
      %452 = vmatprep.subr.mxu0 0.0
      %453 = vmatpush1.msra.mxu0 0.0
      %454 = vmatprep.subr.mxu0 0.0
      %455 = vmatpush1.msra.mxu0 0.0
      %456 = vmatprep.subr.mxu0 0.0
      %457 = vmatpush1.msra.mxu0 0.0
      %458 = vmatprep.subr.mxu0 0.0
      %459 = vmatpush1.msra.mxu0 0.0
      %460 = vmatprep.subr.mxu0 0.0
      %461 = vmatpush1.msra.mxu0 0.0
      %462 = vmatprep.subr.mxu0 0.0
      %463 = vmatpush1.msra.mxu0 0.0
      %464 = vmatprep.subr.mxu0 0.0
      %465 = vmatpush1.msra.mxu0 0.0
      %466 = vmatprep.subr.mxu0 0.0
      %467 = vmatpush1.msra.mxu0 0.0
      %468 = vmatprep.subr.mxu0 0.0
      %469 = vmatpush1.msra.mxu0 0.0
      %470 = vmatprep.subr.mxu0 0.0
      %471 = vmatpush1.msra.mxu0 0.0
      %472 = vmatprep.subr.mxu0 0.0
      %473 = vmatpush1.msra.mxu0 0.0
      %474 = vmatprep.subr.mxu0 0.0
      %475 = vmatpush1.msra.mxu0 0.0
      %476 = vmatprep.subr.mxu0 0.0
      %477 = vmatpush1.msra.mxu0 0.0
      %478 = vmatprep.subr.mxu0 0.0
      %479 = vmatpush1.msra.mxu0 0.0
      %480 = vmatprep.subr.mxu0 0.0
      %481 = vmatpush1.msra.mxu0 0.0
      %482 = vmatprep.subr.mxu0 0.0
      %483 = vmatpush1.msra.mxu0 0.0
      %484 = vmatprep.subr.mxu0 0.0
      %485 = vmatpush1.msra.mxu0 0.0
      %486 = vmatprep.subr.mxu0 0.0
      %487 = vmatpush1.msra.mxu0 0.0
      %488 = vmatprep.subr.mxu0 0.0
      %489 = vmatpush1.msra.mxu0 0.0
      %490 = vmatprep.subr.mxu0 0.0
      %491 = vmatpush1.msra.mxu0 0.0
      %492 = vmatprep.mubr.f32.mxu0 0.0
      %493 = vmatmul.mubr.f32.gmra.mrb[0].mxu0 %v426
      %v494 = vpop.f32.mrb[0].mxu0
      %v495 = vadd.f32 0.0, %v494
      %v496 = vpop.f32.mrb[0].mxu0
      %497 = vdwg.mxu0
      %v499 = vsel %vm424, %v420, 0
      %501 = vmatprep.subr.mxu0 0.0
      %502 = vmatpush1.msra.mxu0 %v422
      %503 = vmatprep.subr.mxu0 0.0
      %504 = vmatpush1.msra.mxu0 0.0
      %505 = vmatprep.subr.mxu0 0.0
      %506 = vmatpush1.msra.mxu0 0.0
      %507 = vmatprep.subr.mxu0 0.0
      %508 = vmatpush1.msra.mxu0 0.0
      %509 = vmatprep.subr.mxu0 0.0
      %510 = vmatpush1.msra.mxu0 0.0
      %511 = vmatprep.subr.mxu0 0.0
      %512 = vmatpush1.msra.mxu0 0.0
      %513 = vmatprep.subr.mxu0 0.0
      %514 = vmatpush1.msra.mxu0 0.0
      %515 = vmatprep.subr.mxu0 0.0
      %516 = vmatpush1.msra.mxu0 0.0
      %517 = vmatprep.subr.mxu0 0.0
      %518 = vmatpush1.msra.mxu0 0.0
      %519 = vmatprep.subr.mxu0 0.0
      %520 = vmatpush1.msra.mxu0 0.0
      %521 = vmatprep.subr.mxu0 0.0
      %522 = vmatpush1.msra.mxu0 0.0
      %523 = vmatprep.subr.mxu0 0.0
      %524 = vmatpush1.msra.mxu0 0.0
      %525 = vmatprep.subr.mxu0 0.0
      %526 = vmatpush1.msra.mxu0 0.0
      %527 = vmatprep.subr.mxu0 0.0
      %528 = vmatpush1.msra.mxu0 0.0
      %529 = vmatprep.subr.mxu0 0.0
      %530 = vmatpush1.msra.mxu0 0.0
      %531 = vmatprep.subr.mxu0 0.0
      %532 = vmatpush1.msra.mxu0 0.0
      %533 = vmatprep.subr.mxu0 0.0
      %534 = vmatpush1.msra.mxu0 0.0
      %535 = vmatprep.subr.mxu0 0.0
      %536 = vmatpush1.msra.mxu0 0.0
      %537 = vmatprep.subr.mxu0 0.0
      %538 = vmatpush1.msra.mxu0 0.0
      %539 = vmatprep.subr.mxu0 0.0
      %540 = vmatpush1.msra.mxu0 0.0
      %541 = vmatprep.subr.mxu0 0.0
      %542 = vmatpush1.msra.mxu0 0.0
      %543 = vmatprep.subr.mxu0 0.0
      %544 = vmatpush1.msra.mxu0 0.0
      %545 = vmatprep.subr.mxu0 0.0
      %546 = vmatpush1.msra.mxu0 0.0
      %547 = vmatprep.subr.mxu0 0.0
      %548 = vmatpush1.msra.mxu0 0.0
      %549 = vmatprep.subr.mxu0 0.0
      %550 = vmatpush1.msra.mxu0 0.0
      %551 = vmatprep.subr.mxu0 0.0
      %552 = vmatpush1.msra.mxu0 0.0
      %553 = vmatprep.subr.mxu0 0.0
      %554 = vmatpush1.msra.mxu0 0.0
      %555 = vmatprep.subr.mxu0 0.0
      %556 = vmatpush1.msra.mxu0 0.0
      %557 = vmatprep.subr.mxu0 0.0
      %558 = vmatpush1.msra.mxu0 0.0
      %559 = vmatprep.subr.mxu0 0.0
      %560 = vmatpush1.msra.mxu0 0.0
      %561 = vmatprep.subr.mxu0 0.0
      %562 = vmatpush1.msra.mxu0 0.0
      %563 = vmatprep.subr.mxu0 0.0
      %564 = vmatpush1.msra.mxu0 0.0
      %565 = vmatprep.mubr.f32.mxu0 0.0
      %566 = vmatmul.mubr.f32.gmra.mrb[0].mxu0 %v499
      %v567 = vpop.f32.mrb[0].mxu0
      %v568 = vadd.f32 %v495, %v567
      %v569 = vpop.f32.mrb[0].mxu0
      %570 = vdwg.mxu0
      %571 = vst [vmem:[%s421] sm:$0xff] %v568
      // Predicated region
      $region45: #{flow_process.3} parent=39 // pred_check
        %p572 = pneg %p300
      $region46: #{flow_process.3} parent=39 // pred_check_branch
        %574 = sbr.rel (%p572) target = $region48
      $region47: #{flow_process.3} parent=39 // pred_region
        %v575 = vld [vmem:[#allocation3] sm:$0xff]
        %v576 = vpack.c.bf16 %v575, %v575
        %577 = vst [vmem:[#allocation2] sm:$0xf] %v576
      $region48: #{flow_process.3} parent=39 // pred_fallthru
        _
      %p578 = scmp.eq.s32.totalorder %s22, 9
      %p579 = pnand %p578, %p300
      %p580 = pneg %p579
      // Predicated region
      $region49: #{flow_process.3} parent=39 // pred_check
        _
      $region50: #{flow_process.3} parent=39 // pred_check_branch
        %582 = sbr.rel (%p579) target = $region52
      $region51: #{flow_process.3} parent=39 // pred_region
        %v583 = vld [vmem:[#allocation4] sm:$0xff]
        %584 = vst [vmem:[%s297] sm:$0xff] %v583
      $region52: #{flow_process.3} parent=39 // pred_fallthru
        _
      %p585 = scmp.lt.s32.totalorder %s21, 1
      %s586 = scalar_select %p585, %s21, 1
      %s587 = smul.addr %s586, 8
      %s588 = scalar_lea.vmem %s5, %s587
      // Predicated region
      $region53: #{flow_process.3} parent=39 // pred_check
        %p589 = pneg %p177
      $region54: #{flow_process.3} parent=39 // pred_check_branch
        %591 = sbr.rel (%p589) target = $region56
      $region55: #{flow_process.3} parent=39 // pred_region
        _
      $region56: #{flow_process.3} parent=39 // pred_fallthru
        _
    $region40: #{flow_process.3} parent=5 // pred_fallthru
      _
    %p592 = scmp.le.s32.totalorder 2, %s11
    // Predicated region
    $region57: #{flow_process.3} parent=5 // pred_check
      %p593 = pneg %p592
    $region58: #{flow_process.3} parent=5 // pred_check_branch
      %595 = sbr.rel (%p593) target = $region60
    $region59: #{flow_process.3} parent=5 // pred_region
      %s596 = ssub.s32 %s11, 2
      // Predicated region
      $region61: #{flow_process.3} parent=59 // pred_check
        %p597 = pneg %p183
      $region62: #{flow_process.3} parent=59 // pred_check_branch
        %599 = sbr.rel (%p597) target = $region64
      $region63: #{flow_process.3} parent=59 // pred_region
        %p600 = scmp.lt.s32.totalorder %s24, 1
        %s601 = scalar_select %p600, %s24, 1
        %s602 = smul.addr %s601, 8
        %s603 = scalar_lea.vmem %s5, %s602
      $region64: #{flow_process.3} parent=59 // pred_fallthru
        _
    $region60: #{flow_process.3} parent=5 // pred_fallthru
      _
  $region6: #{flow_process.3} parent=0 // loop_footer
    %s15 = sadd.s32 1, %s11
  $region7: #{flow_process.3} parent=0 // loop_footer_branch
    %10 = sbr.rel target = $region3
  $region8: #{flow_process.3} parent=0 // loop_exit
    _

// kernel: flow_process.2
$region0: #{flow_process.2}
  #allocation0 [shape = 'u32[]', space=smem, size = 0x4, offset = 0x4, fixed_abs, tag = 'smem constant byte address 0x4 - core index']
  #allocation1 [shape = 'u32[144,128]{1,0:T(1,128)}', space=vmem, size = 0x12000, scoped, tag = 'internal scratch']
  %s0 = inlined_call_operand.vmem [shape: f32[2,36,2048], index: 0, kind: input, shape index: {}]
  %s1 = inlined_call_operand.vmem [shape: f32[16,36], index: 1, kind: input, shape index: {}]
  %s2 = inlined_call_operand.vmem [shape: f32[2,8,128], index: 2, kind: output, shape index: {0}]
  %s3 = inlined_call_operand.vmem [shape: f32[2,8,128], index: 3, kind: output, shape index: {1}]
  %4 = xla_tuple %s2, %s3
  %s5 = sld [smem:[#allocation0]]
  $region49: #{flow_process.2} parent=0
    _
  %s7 = ssub.s32 1, %s5
  %s8 = scalar_select 0, %s7, %s5
  loop: start=0, step=1, limit=4
  $region2: #{flow_process.2} parent=0 // loop_pre_header
    _
  $region3: #{flow_process.2} parent=0 // loop_header
    %s10 = sphi 0, %s14
    %p11 = scmp.ge.s32.totalorder %s10, 4
    %s20 = sphi 0, %s22
    %s23 = sphi 0, %s20
    %s24 = sphi 0, %s23
    %s40 = sphi 0, %s24
    %s44 = sphi 0, %s44
    %s46 = sphi 0, %s44
    %s47 = sphi 0, %s46
    %s61 = sphi 0, %s47
    %s67 = sphi 0, %s69
    %s70 = sphi 0, %s67
    %s71 = sphi 0, %s70
    %s87 = sphi 0, %s71
    %s93 = sphi 0, %s95
    %s96 = sphi 0, %s93
    %s97 = sphi 0, %s96
    %s113 = sphi 0, %s97
  $region4: #{flow_process.2} parent=0 // loop_header_branch
    %13 = sbr.rel (%p11) target = $region8
  $region5: #{flow_process.2} parent=0 // loop_body
    %s15 = ssub.s32 %s10, 1
    %s16 = ssub.s32 %s10, 2
    %s17 = sadd.s32 %s10, 1
    %s18 = ssub.s32 %s10, %s17
    %p19 = scmp.eq.s32.totalorder %s18, 0
    %s21 = sadd.s32 %s20, 1
    %s22 = scalar_select %p19, %s20, %s21
    %p25 = pneg %p19
    %p26 = scmp.eq.s32.totalorder %s10, 1
    %p27 = por %p25, %p26
    %p28 = scmp.ne.s32.totalorder %s20, %s23
    %p29 = scmp.eq.s32.totalorder %s10, 0
    %p30 = por %p28, %p29
    %p31 = scmp.ne.s32.totalorder %s20, %s23
    %p32 = scmp.eq.s32.totalorder %s15, 1
    %p33 = por %p31, %p32
    %p34 = scmp.ne.s32.totalorder %s23, %s24
    %p35 = scmp.eq.s32.totalorder %s15, 0
    %p36 = por %p34, %p35
    %p37 = scmp.ne.s32.totalorder %s23, %s24
    %p38 = scmp.eq.s32.totalorder %s16, 1
    %p39 = por %p37, %p38
    %p41 = scmp.ne.s32.totalorder %s24, %s40
    %p42 = scmp.eq.s32.totalorder %s16, 0
    %p43 = por %p41, %p42
    %s45 = sadd.s32 %s44, 1
    %p48 = scmp.eq.s32.totalorder %s10, 1
    %p49 = scmp.ne.s32.totalorder %s44, %s46
    %p50 = scmp.eq.s32.totalorder %s10, 0
    %p51 = por %p49, %p50
    %p52 = scmp.ne.s32.totalorder %s44, %s46
    %p53 = scmp.eq.s32.totalorder %s15, 1
    %p54 = por %p52, %p53
    %p55 = scmp.ne.s32.totalorder %s46, %s47
    %p56 = scmp.eq.s32.totalorder %s15, 0
    %p57 = por %p55, %p56
    %p58 = scmp.ne.s32.totalorder %s46, %s47
    %p59 = scmp.eq.s32.totalorder %s16, 1
    %p60 = por %p58, %p59
    %p62 = scmp.ne.s32.totalorder %s47, %s61
    %p63 = scmp.eq.s32.totalorder %s16, 0
    %p64 = por %p62, %p63
    %s65 = ssub.s32 %s10, %s17
    %p66 = scmp.eq.s32.totalorder %s65, 0
    %s68 = sadd.s32 %s67, 1
    %s69 = scalar_select %p66, %s67, %s68
    %p72 = pneg %p66
    %p73 = scmp.eq.s32.totalorder %s10, 1
    %p74 = por %p72, %p73
    %p75 = scmp.ne.s32.totalorder %s67, %s70
    %p76 = scmp.eq.s32.totalorder %s10, 0
    %p77 = por %p75, %p76
    %p78 = scmp.ne.s32.totalorder %s67, %s70
    %p79 = scmp.eq.s32.totalorder %s15, 1
    %p80 = por %p78, %p79
    %p81 = scmp.ne.s32.totalorder %s70, %s71
    %p82 = scmp.eq.s32.totalorder %s15, 0
    %p83 = por %p81, %p82
    %p84 = scmp.ne.s32.totalorder %s70, %s71
    %p85 = scmp.eq.s32.totalorder %s16, 1
    %p86 = por %p84, %p85
    %p88 = scmp.ne.s32.totalorder %s71, %s87
    %p89 = scmp.eq.s32.totalorder %s16, 0
    %p90 = por %p88, %p89
    %s91 = ssub.s32 %s10, %s17
    %p92 = scmp.eq.s32.totalorder %s91, 0
    %s94 = sadd.s32 %s93, 1
    %s95 = scalar_select %p92, %s93, %s94
    %p98 = pneg %p92
    %p99 = scmp.eq.s32.totalorder %s10, 1
    %p100 = por %p98, %p99
    %p101 = scmp.ne.s32.totalorder %s93, %s96
    %p102 = scmp.eq.s32.totalorder %s10, 0
    %p103 = por %p101, %p102
    %p104 = scmp.ne.s32.totalorder %s93, %s96
    %p105 = scmp.eq.s32.totalorder %s15, 1
    %p106 = por %p104, %p105
    %p107 = scmp.ne.s32.totalorder %s96, %s97
    %p108 = scmp.eq.s32.totalorder %s15, 0
    %p109 = por %p107, %p108
    %p110 = scmp.ne.s32.totalorder %s96, %s97
    %p111 = scmp.eq.s32.totalorder %s16, 1
    %p112 = por %p110, %p111
    %p114 = scmp.ne.s32.totalorder %s97, %s113
    %p115 = scmp.eq.s32.totalorder %s16, 0
    %p116 = por %p114, %p115
    %p117 = scmp.le.s32.totalorder 1, %s10
    %p118 = scmp.lt.s32.totalorder %s10, 3
    %p119 = pnand %p117, %p118
    %p120 = pneg %p119
    // Predicated region
    $region9: #{flow_process.2} parent=5 // pred_check
      _
    $region10: #{flow_process.2} parent=5 // pred_check_branch
      %122 = sbr.rel (%p119) target = $region12
    $region11: #{flow_process.2} parent=5 // pred_region
      %s123 = ssub.s32 %s10, 1
      // Predicated region
      $region13: #{flow_process.2} parent=11 // pred_check
        %p124 = pneg %p57
      $region14: #{flow_process.2} parent=11 // pred_check_branch
        %126 = sbr.rel (%p124) target = $region16
      $region15: #{flow_process.2} parent=11 // pred_region
        _
      $region16: #{flow_process.2} parent=11 // pred_fallthru
        _
    $region12: #{flow_process.2} parent=5 // pred_fallthru
      _
    %p127 = scmp.lt.s32.totalorder %s10, 2
    // Predicated region
    $region17: #{flow_process.2} parent=5 // pred_check
      %p128 = pneg %p127
    $region18: #{flow_process.2} parent=5 // pred_check_branch
      %130 = sbr.rel (%p128) target = $region20
    $region19: #{flow_process.2} parent=5 // pred_region
      // Predicated region
      $region21: #{flow_process.2} parent=19 // pred_check
        %p131 = pneg %p30
      $region22: #{flow_process.2} parent=19 // pred_check_branch
        %133 = sbr.rel (%p131) target = $region24
      $region23: #{flow_process.2} parent=19 // pred_region
        %p134 = scmp.lt.s32.totalorder %s10, 1
        %s135 = scalar_select %p134, %s10, 1
        %s136 = smul.addr %s135, 80
        %s137 = smul.addr %s136, 8
        %s138 = scalar_lea.vmem %s0, %s137
      $region24: #{flow_process.2} parent=19 // pred_fallthru
        _
    $region20: #{flow_process.2} parent=5 // pred_fallthru
      _
    %p139 = scmp.le.s32.totalorder 1, %s10
    %p140 = scmp.lt.s32.totalorder %s10, 3
    %p141 = pnand %p139, %p140
    %p142 = pneg %p141
    // Predicated region
    $region25: #{flow_process.2} parent=5 // pred_check
      _
    $region26: #{flow_process.2} parent=5 // pred_check_branch
      %144 = sbr.rel (%p141) target = $region28
    $region27: #{flow_process.2} parent=5 // pred_region
      %s145 = ssub.s32 %s10, 1
      %p146 = scmp.lt.s32.totalorder %s15, 1
      %s147 = scalar_select %p146, %s15, 1
      %s148 = smul.addr %s147, 80
      %s149 = smul.addr %s148, 8
      %s150 = scalar_lea.vmem %s0, %s149
      %p151 = pneg %p36
      %p152 = pneg %p33
      %p153 = pneg %p57
      %p154 = pneg %p54
      %p155 = pneg %p83
      %p156 = pneg %p80
      %p157 = scmp.lt.s32.totalorder %s15, 1
      %s158 = scalar_select %p157, %s15, 1
      %s159 = smul.addr %s158, 8
      %s160 = scalar_lea.vmem %s2, %s159
      %p161 = pneg %p109
      %p162 = pneg %p106
      %p163 = scmp.lt.s32.totalorder %s15, 1
      %s164 = scalar_select %p163, %s15, 1
      %s165 = smul.addr %s164, 8
      %s166 = scalar_lea.vmem %s3, %s165
      %p167 = scmp.lt.s32.totalorder %s15, 1
      %s168 = scalar_select %p167, %s15, 1
      %s169 = smul.addr %s168, 80
      %s170 = smul.addr %s169, 8
      %s171 = scalar_lea.vmem %s0, %s170
      %p172 = scmp.lt.s32.totalorder %s15, 1
      %s173 = scalar_select %p172, %s15, 1
      %s174 = smul.addr %s173, 8
      %s175 = scalar_lea.vmem %s2, %s174
      %p176 = scmp.lt.s32.totalorder %s15, 1
      %s177 = scalar_select %p176, %s15, 1
      %s178 = smul.addr %s177, 8
      %s179 = scalar_lea.vmem %s3, %s178
      %v180 = vld [vmem:[%s1] sm:$0xff]
      %v181 = vld [vmem:[%s1 + $0x8] sm:$0xff]
      %v182 = vld [vmem:[%s171] sm:$0xff]
      %v183 = vld [vmem:[%s171 + $0x8] sm:$0xff]
      %v184 = vld [vmem:[%s171 + $0x10] sm:$0xff]
      %v185 = vld [vmem:[%s171 + $0x18] sm:$0xff]
      %v186 = vld [vmem:[%s171 + $0x20] sm:$0xff]
      %v187 = vld [vmem:[%s171 + $0x28] sm:$0xff]
      %v188 = vld [vmem:[%s171 + $0x30] sm:$0xff]
      %v189 = vld [vmem:[%s171 + $0x38] sm:$0xff]
      %v190 = vld [vmem:[%s171 + $0x40] sm:$0xff]
      %v191 = vld [vmem:[%s171 + $0x48] sm:$0xff]
      %v192 = vld [vmem:[%s171 + $0x50] sm:$0xff]
      %v193 = vld [vmem:[%s171 + $0x58] sm:$0xff]
      %v194 = vld [vmem:[%s171 + $0x60] sm:$0xff]
      %v195 = vld [vmem:[%s171 + $0x68] sm:$0xff]
      %v196 = vld [vmem:[%s171 + $0x70] sm:$0xff]
      %v197 = vld [vmem:[%s171 + $0x78] sm:$0xff]
      %v198 = vld [vmem:[%s171 + $0x80] sm:$0xff]
      %v199 = vld [vmem:[%s171 + $0x88] sm:$0xff]
      %v200 = vld [vmem:[%s171 + $0x90] sm:$0xff]
      %v201 = vld [vmem:[%s171 + $0x98] sm:$0xff]
      %v202 = vld [vmem:[%s171 + $0xa0] sm:$0xff]
      %v203 = vld [vmem:[%s171 + $0xa8] sm:$0xff]
      %v204 = vld [vmem:[%s171 + $0xb0] sm:$0xff]
      %v205 = vld [vmem:[%s171 + $0xb8] sm:$0xff]
      %v206 = vld [vmem:[%s171 + $0xc0] sm:$0xff]
      %v207 = vld [vmem:[%s171 + $0xc8] sm:$0xff]
      %v208 = vld [vmem:[%s171 + $0xd0] sm:$0xff]
      %v209 = vld [vmem:[%s171 + $0xd8] sm:$0xff]
      %v210 = vld [vmem:[%s171 + $0xe0] sm:$0xff]
      %v211 = vld [vmem:[%s171 + $0xe8] sm:$0xff]
      %v212 = vld [vmem:[%s171 + $0xf0] sm:$0xff]
      %v213 = vld [vmem:[%s171 + $0xf8] sm:$0xff]
      %v214 = vld [vmem:[%s171 + $0x100] sm:$0xff]
      %v215 = vld [vmem:[%s171 + $0x108] sm:$0xff]
      %v216 = vld [vmem:[%s171 + $0x110] sm:$0xff]
      %v217 = vld [vmem:[%s171 + $0x118] sm:$0xff]
      %v218 = vld [vmem:[%s171 + $0x120] sm:$0xff]
      %v219 = vld [vmem:[%s171 + $0x128] sm:$0xff]
      %v220 = vld [vmem:[%s171 + $0x130] sm:$0xff]
      %v221 = vld [vmem:[%s171 + $0x138] sm:$0xff]
      %v222 = vld [vmem:[%s171 + $0x140] sm:$0xff]
      %v223 = vld [vmem:[%s171 + $0x148] sm:$0xff]
      %v224 = vld [vmem:[%s171 + $0x150] sm:$0xff]
      %v225 = vld [vmem:[%s171 + $0x158] sm:$0xff]
      %v226 = vld [vmem:[%s171 + $0x160] sm:$0xff]
      %v227 = vld [vmem:[%s171 + $0x168] sm:$0xff]
      %v228 = vld [vmem:[%s171 + $0x170] sm:$0xff]
      %v229 = vld [vmem:[%s171 + $0x178] sm:$0xff]
      %v230 = vld [vmem:[%s171 + $0x180] sm:$0xff]
      %v231 = vld [vmem:[%s171 + $0x188] sm:$0xff]
      %v232 = vld [vmem:[%s171 + $0x190] sm:$0xff]
      %v233 = vld [vmem:[%s171 + $0x198] sm:$0xff]
      %v234 = vld [vmem:[%s171 + $0x1a0] sm:$0xff]
      %v235 = vld [vmem:[%s171 + $0x1a8] sm:$0xff]
      %v236 = vld [vmem:[%s171 + $0x1b0] sm:$0xff]
      %v237 = vld [vmem:[%s171 + $0x1b8] sm:$0xff]
      %v238 = vld [vmem:[%s171 + $0x1c0] sm:$0xff]
      %v239 = vld [vmem:[%s171 + $0x1c8] sm:$0xff]
      %v240 = vld [vmem:[%s171 + $0x1d0] sm:$0xff]
      %v241 = vld [vmem:[%s171 + $0x1d8] sm:$0xff]
      %v242 = vld [vmem:[%s171 + $0x1e0] sm:$0xff]
      %v243 = vld [vmem:[%s171 + $0x1e8] sm:$0xff]
      %v244 = vld [vmem:[%s171 + $0x1f0] sm:$0xff]
      %v245 = vld [vmem:[%s171 + $0x1f8] sm:$0xff]
      %v246 = vld [vmem:[%s171 + $0x200] sm:$0xf]
      %v247 = vld [vmem:[%s171 + $0x208] sm:$0xf]
      %v248 = vld [vmem:[%s171 + $0x210] sm:$0xf]
      %v249 = vld [vmem:[%s171 + $0x218] sm:$0xf]
      %v250 = vld [vmem:[%s171 + $0x220] sm:$0xf]
      %v251 = vld [vmem:[%s171 + $0x228] sm:$0xf]
      %v252 = vld [vmem:[%s171 + $0x230] sm:$0xf]
      %v253 = vld [vmem:[%s171 + $0x238] sm:$0xf]
      %v254 = vld [vmem:[%s171 + $0x240] sm:$0xf]
      %v255 = vld [vmem:[%s171 + $0x248] sm:$0xf]
      %v256 = vld [vmem:[%s171 + $0x250] sm:$0xf]
      %v257 = vld [vmem:[%s171 + $0x258] sm:$0xf]
      %v258 = vld [vmem:[%s171 + $0x260] sm:$0xf]
      %v259 = vld [vmem:[%s171 + $0x268] sm:$0xf]
      %v260 = vld [vmem:[%s171 + $0x270] sm:$0xf]
      %v261 = vld [vmem:[%s171 + $0x278] sm:$0xf]
      %vm262 = vcmask 293888
      %v264 = vsel %vm262, %v180, 0
      %v267 = vsel %vm262, %v181, 0
      %vm269 = vcmask 1043456
      %v271 = vsel %vm269, %v246, 0
      %v274 = vsel %vm269, %v247, 0
      %v277 = vsel %vm269, %v248, 0
      %v280 = vsel %vm269, %v249, 0
      %v283 = vsel %vm269, %v250, 0
      %v286 = vsel %vm269, %v251, 0
      %v289 = vsel %vm269, %v252, 0
      %v292 = vsel %vm269, %v253, 0
      %v295 = vsel %vm269, %v254, 0
      %v298 = vsel %vm269, %v255, 0
      %v301 = vsel %vm269, %v256, 0
      %v304 = vsel %vm269, %v257, 0
      %v307 = vsel %vm269, %v258, 0
      %v310 = vsel %vm269, %v259, 0
      %v313 = vsel %vm269, %v260, 0
      %v316 = vsel %vm269, %v261, 0
      %318 = vmatprep.subr.mxu0 %v183
      %319 = vmatpush1.msra.mxu0 %v182
      %320 = vmatprep.subr.mxu0 %v199
      %321 = vmatpush1.msra.mxu0 %v198
      %322 = vmatprep.subr.mxu0 %v215
      %323 = vmatpush1.msra.mxu0 %v214
      %324 = vmatprep.subr.mxu0 %v231
      %325 = vmatpush1.msra.mxu0 %v230
      %326 = vmatprep.subr.mxu0 %v274
      %327 = vmatpush1.msra.mxu0 %v271
      %328 = vmatprep.subr.mxu0 0.0
      %329 = vmatpush1.msra.mxu0 0.0
      %330 = vmatprep.subr.mxu0 0.0
      %331 = vmatpush1.msra.mxu0 0.0
      %332 = vmatprep.subr.mxu0 0.0
      %333 = vmatpush1.msra.mxu0 0.0
      %334 = vmatprep.subr.mxu0 0.0
      %335 = vmatpush1.msra.mxu0 0.0
      %336 = vmatprep.subr.mxu0 0.0
      %337 = vmatpush1.msra.mxu0 0.0
      %338 = vmatprep.subr.mxu0 0.0
      %339 = vmatpush1.msra.mxu0 0.0
      %340 = vmatprep.subr.mxu0 0.0
      %341 = vmatpush1.msra.mxu0 0.0
      %342 = vmatprep.subr.mxu0 0.0
      %343 = vmatpush1.msra.mxu0 0.0
      %344 = vmatprep.subr.mxu0 0.0
      %345 = vmatpush1.msra.mxu0 0.0
      %346 = vmatprep.subr.mxu0 0.0
      %347 = vmatpush1.msra.mxu0 0.0
      %348 = vmatprep.subr.mxu0 0.0
      %349 = vmatpush1.msra.mxu0 0.0
      %350 = vmatprep.subr.mxu0 0.0
      %351 = vmatpush1.msra.mxu0 0.0
      %352 = vmatprep.subr.mxu0 0.0
      %353 = vmatpush1.msra.mxu0 0.0
      %354 = vmatprep.subr.mxu0 0.0
      %355 = vmatpush1.msra.mxu0 0.0
      %356 = vmatprep.subr.mxu0 0.0
      %357 = vmatpush1.msra.mxu0 0.0
      %358 = vmatprep.subr.mxu0 0.0
      %359 = vmatpush1.msra.mxu0 0.0
      %360 = vmatprep.subr.mxu0 0.0
      %361 = vmatpush1.msra.mxu0 0.0
      %362 = vmatprep.subr.mxu0 0.0
      %363 = vmatpush1.msra.mxu0 0.0
      %364 = vmatprep.subr.mxu0 0.0
      %365 = vmatpush1.msra.mxu0 0.0
      %366 = vmatprep.subr.mxu0 0.0
      %367 = vmatpush1.msra.mxu0 0.0
      %368 = vmatprep.subr.mxu0 0.0
      %369 = vmatpush1.msra.mxu0 0.0
      %370 = vmatprep.subr.mxu0 0.0
      %371 = vmatpush1.msra.mxu0 0.0
      %372 = vmatprep.subr.mxu0 0.0
      %373 = vmatpush1.msra.mxu0 0.0
      %374 = vmatprep.subr.mxu0 0.0
      %375 = vmatpush1.msra.mxu0 0.0
      %376 = vmatprep.subr.mxu0 0.0
      %377 = vmatpush1.msra.mxu0 0.0
      %378 = vmatprep.subr.mxu0 0.0
      %379 = vmatpush1.msra.mxu0 0.0
      %380 = vmatprep.subr.mxu0 0.0
      %381 = vmatpush1.msra.mxu0 0.0
      %382 = vmatprep.mubr.f32.mxu0 0.0
      %383 = vmatmul.mubr.f32.gmra.mrb[0].mxu0 %v264
      %v384 = vpop.f32.mrb[0].mxu0
      %v385 = vadd.f32 0.0, %v384
      %v386 = vpop.f32.mrb[0].mxu0
      %v387 = vadd.f32 0.0, %v386
      %388 = vmatprep.mubr.f32.mxu0 0.0
      %389 = vmatmul.mubr.f32.gmra.mrb[0].mxu0 %v267
      %v390 = vpop.f32.mrb[0].mxu0
      %v391 = vadd.f32 0.0, %v390
      %v392 = vpop.f32.mrb[0].mxu0
      %v393 = vadd.f32 0.0, %v392
      %394 = vdwg.mxu0
      %395 = vmatprep.subr.mxu0 %v185
      %396 = vmatpush1.msra.mxu0 %v184
      %397 = vmatprep.subr.mxu0 %v201
      %398 = vmatpush1.msra.mxu0 %v200
      %399 = vmatprep.subr.mxu0 %v217
      %400 = vmatpush1.msra.mxu0 %v216
      %401 = vmatprep.subr.mxu0 %v233
      %402 = vmatpush1.msra.mxu0 %v232
      %403 = vmatprep.subr.mxu0 %v280
      %404 = vmatpush1.msra.mxu0 %v277
      %405 = vmatprep.subr.mxu0 0.0
      %406 = vmatpush1.msra.mxu0 0.0
      %407 = vmatprep.subr.mxu0 0.0
      %408 = vmatpush1.msra.mxu0 0.0
      %409 = vmatprep.subr.mxu0 0.0
      %410 = vmatpush1.msra.mxu0 0.0
      %411 = vmatprep.subr.mxu0 0.0
      %412 = vmatpush1.msra.mxu0 0.0
      %413 = vmatprep.subr.mxu0 0.0
      %414 = vmatpush1.msra.mxu0 0.0
      %415 = vmatprep.subr.mxu0 0.0
      %416 = vmatpush1.msra.mxu0 0.0
      %417 = vmatprep.subr.mxu0 0.0
      %418 = vmatpush1.msra.mxu0 0.0
      %419 = vmatprep.subr.mxu0 0.0
      %420 = vmatpush1.msra.mxu0 0.0
      %421 = vmatprep.subr.mxu0 0.0
      %422 = vmatpush1.msra.mxu0 0.0
      %423 = vmatprep.subr.mxu0 0.0
      %424 = vmatpush1.msra.mxu0 0.0
      %425 = vmatprep.subr.mxu0 0.0
      %426 = vmatpush1.msra.mxu0 0.0
      %427 = vmatprep.subr.mxu0 0.0
      %428 = vmatpush1.msra.mxu0 0.0
      %429 = vmatprep.subr.mxu0 0.0
      %430 = vmatpush1.msra.mxu0 0.0
      %431 = vmatprep.subr.mxu0 0.0
      %432 = vmatpush1.msra.mxu0 0.0
      %433 = vmatprep.subr.mxu0 0.0
      %434 = vmatpush1.msra.mxu0 0.0
      %435 = vmatprep.subr.mxu0 0.0
      %436 = vmatpush1.msra.mxu0 0.0
      %437 = vmatprep.subr.mxu0 0.0
      %438 = vmatpush1.msra.mxu0 0.0
      %439 = vmatprep.subr.mxu0 0.0
      %440 = vmatpush1.msra.mxu0 0.0
      %441 = vmatprep.subr.mxu0 0.0
      %442 = vmatpush1.msra.mxu0 0.0
      %443 = vmatprep.subr.mxu0 0.0
      %444 = vmatpush1.msra.mxu0 0.0
      %445 = vmatprep.subr.mxu0 0.0
      %446 = vmatpush1.msra.mxu0 0.0
      %447 = vmatprep.subr.mxu0 0.0
      %448 = vmatpush1.msra.mxu0 0.0
      %449 = vmatprep.subr.mxu0 0.0
      %450 = vmatpush1.msra.mxu0 0.0
      %451 = vmatprep.subr.mxu0 0.0
      %452 = vmatpush1.msra.mxu0 0.0
      %453 = vmatprep.subr.mxu0 0.0
      %454 = vmatpush1.msra.mxu0 0.0
      %455 = vmatprep.subr.mxu0 0.0
      %456 = vmatpush1.msra.mxu0 0.0
      %457 = vmatprep.subr.mxu0 0.0
      %458 = vmatpush1.msra.mxu0 0.0
      %459 = vmatprep.mubr.f32.mxu0 0.0
      %460 = vmatmul.mubr.f32.gmra.mrb[0].mxu0 %v264
      %v461 = vpop.f32.mrb[0].mxu0
      %v462 = vadd.f32 0.0, %v461
      %v463 = vpop.f32.mrb[0].mxu0
      %v464 = vadd.f32 0.0, %v463
      %465 = vmatprep.mubr.f32.mxu0 0.0
      %466 = vmatmul.mubr.f32.gmra.mrb[0].mxu0 %v267
      %v467 = vpop.f32.mrb[0].mxu0
      %v468 = vadd.f32 0.0, %v467
      %v469 = vpop.f32.mrb[0].mxu0
      %v470 = vadd.f32 0.0, %v469
      %471 = vdwg.mxu0
      %472 = vmatprep.subr.mxu0 %v187
      %473 = vmatpush1.msra.mxu0 %v186
      %474 = vmatprep.subr.mxu0 %v203
      %475 = vmatpush1.msra.mxu0 %v202
      %476 = vmatprep.subr.mxu0 %v219
      %477 = vmatpush1.msra.mxu0 %v218
      %478 = vmatprep.subr.mxu0 %v235
      %479 = vmatpush1.msra.mxu0 %v234
      %480 = vmatprep.subr.mxu0 %v286
      %481 = vmatpush1.msra.mxu0 %v283
      %482 = vmatprep.subr.mxu0 0.0
      %483 = vmatpush1.msra.mxu0 0.0
      %484 = vmatprep.subr.mxu0 0.0
      %485 = vmatpush1.msra.mxu0 0.0
      %486 = vmatprep.subr.mxu0 0.0
      %487 = vmatpush1.msra.mxu0 0.0
      %488 = vmatprep.subr.mxu0 0.0
      %489 = vmatpush1.msra.mxu0 0.0
      %490 = vmatprep.subr.mxu0 0.0
      %491 = vmatpush1.msra.mxu0 0.0
      %492 = vmatprep.subr.mxu0 0.0
      %493 = vmatpush1.msra.mxu0 0.0
      %494 = vmatprep.subr.mxu0 0.0
      %495 = vmatpush1.msra.mxu0 0.0
      %496 = vmatprep.subr.mxu0 0.0
      %497 = vmatpush1.msra.mxu0 0.0
      %498 = vmatprep.subr.mxu0 0.0
      %499 = vmatpush1.msra.mxu0 0.0
      %500 = vmatprep.subr.mxu0 0.0
      %501 = vmatpush1.msra.mxu0 0.0
      %502 = vmatprep.subr.mxu0 0.0
      %503 = vmatpush1.msra.mxu0 0.0
      %504 = vmatprep.subr.mxu0 0.0
      %505 = vmatpush1.msra.mxu0 0.0
      %506 = vmatprep.subr.mxu0 0.0
      %507 = vmatpush1.msra.mxu0 0.0
      %508 = vmatprep.subr.mxu0 0.0
      %509 = vmatpush1.msra.mxu0 0.0
      %510 = vmatprep.subr.mxu0 0.0
      %511 = vmatpush1.msra.mxu0 0.0
      %512 = vmatprep.subr.mxu0 0.0
      %513 = vmatpush1.msra.mxu0 0.0
      %514 = vmatprep.subr.mxu0 0.0
      %515 = vmatpush1.msra.mxu0 0.0
      %516 = vmatprep.subr.mxu0 0.0
      %517 = vmatpush1.msra.mxu0 0.0
      %518 = vmatprep.subr.mxu0 0.0
      %519 = vmatpush1.msra.mxu0 0.0
      %520 = vmatprep.subr.mxu0 0.0
      %521 = vmatpush1.msra.mxu0 0.0
      %522 = vmatprep.subr.mxu0 0.0
      %523 = vmatpush1.msra.mxu0 0.0
      %524 = vmatprep.subr.mxu0 0.0
      %525 = vmatpush1.msra.mxu0 0.0
      %526 = vmatprep.subr.mxu0 0.0
      %527 = vmatpush1.msra.mxu0 0.0
      %528 = vmatprep.subr.mxu0 0.0
      %529 = vmatpush1.msra.mxu0 0.0
      %530 = vmatprep.subr.mxu0 0.0
      %531 = vmatpush1.msra.mxu0 0.0
      %532 = vmatprep.subr.mxu0 0.0
      %533 = vmatpush1.msra.mxu0 0.0
      %534 = vmatprep.subr.mxu0 0.0
      %535 = vmatpush1.msra.mxu0 0.0
      %536 = vmatprep.mubr.f32.mxu0 0.0
      %537 = vmatmul.mubr.f32.gmra.mrb[0].mxu0 %v264
      %v538 = vpop.f32.mrb[0].mxu0
      %v539 = vadd.f32 0.0, %v538
      %v540 = vpop.f32.mrb[0].mxu0
      %v541 = vadd.f32 0.0, %v540
      %542 = vmatprep.mubr.f32.mxu0 0.0
      %543 = vmatmul.mubr.f32.gmra.mrb[0].mxu0 %v267
      %v544 = vpop.f32.mrb[0].mxu0
      %v545 = vadd.f32 0.0, %v544
      %v546 = vpop.f32.mrb[0].mxu0
      %v547 = vadd.f32 0.0, %v546
      %548 = vdwg.mxu0
      %549 = vmatprep.subr.mxu0 %v189
      %550 = vmatpush1.msra.mxu0 %v188
      %551 = vmatprep.subr.mxu0 %v205
      %552 = vmatpush1.msra.mxu0 %v204
      %553 = vmatprep.subr.mxu0 %v221
      %554 = vmatpush1.msra.mxu0 %v220
      %555 = vmatprep.subr.mxu0 %v237
      %556 = vmatpush1.msra.mxu0 %v236
      %557 = vmatprep.subr.mxu0 %v292
      %558 = vmatpush1.msra.mxu0 %v289
      %559 = vmatprep.subr.mxu0 0.0
      %560 = vmatpush1.msra.mxu0 0.0
      %561 = vmatprep.subr.mxu0 0.0
      %562 = vmatpush1.msra.mxu0 0.0
      %563 = vmatprep.subr.mxu0 0.0
      %564 = vmatpush1.msra.mxu0 0.0
      %565 = vmatprep.subr.mxu0 0.0
      %566 = vmatpush1.msra.mxu0 0.0
      %567 = vmatprep.subr.mxu0 0.0
      %568 = vmatpush1.msra.mxu0 0.0
      %569 = vmatprep.subr.mxu0 0.0
      %570 = vmatpush1.msra.mxu0 0.0
      %571 = vmatprep.subr.mxu0 0.0
      %572 = vmatpush1.msra.mxu0 0.0
      %573 = vmatprep.subr.mxu0 0.0
      %574 = vmatpush1.msra.mxu0 0.0
      %575 = vmatprep.subr.mxu0 0.0
      %576 = vmatpush1.msra.mxu0 0.0
      %577 = vmatprep.subr.mxu0 0.0
      %578 = vmatpush1.msra.mxu0 0.0
      %579 = vmatprep.subr.mxu0 0.0
      %580 = vmatpush1.msra.mxu0 0.0
      %581 = vmatprep.subr.mxu0 0.0
      %582 = vmatpush1.msra.mxu0 0.0
      %583 = vmatprep.subr.mxu0 0.0
      %584 = vmatpush1.msra.mxu0 0.0
      %585 = vmatprep.subr.mxu0 0.0
      %586 = vmatpush1.msra.mxu0 0.0
      %587 = vmatprep.subr.mxu0 0.0
      %588 = vmatpush1.msra.mxu0 0.0
      %589 = vmatprep.subr.mxu0 0.0
      %590 = vmatpush1.msra.mxu0 0.0
      %591 = vmatprep.subr.mxu0 0.0
      %592 = vmatpush1.msra.mxu0 0.0
      %593 = vmatprep.subr.mxu0 0.0
      %594 = vmatpush1.msra.mxu0 0.0
      %595 = vmatprep.subr.mxu0 0.0
      %596 = vmatpush1.msra.mxu0 0.0
      %597 = vmatprep.subr.mxu0 0.0
      %598 = vmatpush1.msra.mxu0 0.0
      %599 = vmatprep.subr.mxu0 0.0
      %600 = vmatpush1.msra.mxu0 0.0
      %601 = vmatprep.subr.mxu0 0.0
      %602 = vmatpush1.msra.mxu0 0.0
      %603 = vmatprep.subr.mxu0 0.0
      %604 = vmatpush1.msra.mxu0 0.0
      %605 = vmatprep.subr.mxu0 0.0
      %606 = vmatpush1.msra.mxu0 0.0
      %607 = vmatprep.subr.mxu0 0.0
      %608 = vmatpush1.msra.mxu0 0.0
      %609 = vmatprep.subr.mxu0 0.0
      %610 = vmatpush1.msra.mxu0 0.0
      %611 = vmatprep.subr.mxu0 0.0
      %612 = vmatpush1.msra.mxu0 0.0
      %613 = vmatprep.mubr.f32.mxu0 0.0
      %614 = vmatmul.mubr.f32.gmra.mrb[0].mxu0 %v264
      %v615 = vpop.f32.mrb[0].mxu0
      %v616 = vadd.f32 0.0, %v615
      %v617 = vpop.f32.mrb[0].mxu0
      %v618 = vadd.f32 0.0, %v617
      %619 = vmatprep.mubr.f32.mxu0 0.0
      %620 = vmatmul.mubr.f32.gmra.mrb[0].mxu0 %v267
      %v621 = vpop.f32.mrb[0].mxu0
      %v622 = vadd.f32 0.0, %v621
      %v623 = vpop.f32.mrb[0].mxu0
      %v624 = vadd.f32 0.0, %v623
      %625 = vdwg.mxu0
      %626 = vmatprep.subr.mxu0 %v191
      %627 = vmatpush1.msra.mxu0 %v190
      %628 = vmatprep.subr.mxu0 %v207
      %629 = vmatpush1.msra.mxu0 %v206
      %630 = vmatprep.subr.mxu0 %v223
      %631 = vmatpush1.msra.mxu0 %v222
      %632 = vmatprep.subr.mxu0 %v239
      %633 = vmatpush1.msra.mxu0 %v238
      %634 = vmatprep.subr.mxu0 %v298
      %635 = vmatpush1.msra.mxu0 %v295
      %636 = vmatprep.subr.mxu0 0.0
      %637 = vmatpush1.msra.mxu0 0.0
      %638 = vmatprep.subr.mxu0 0.0
      %639 = vmatpush1.msra.mxu0 0.0
      %640 = vmatprep.subr.mxu0 0.0
      %641 = vmatpush1.msra.mxu0 0.0
      %642 = vmatprep.subr.mxu0 0.0
      %643 = vmatpush1.msra.mxu0 0.0
      %644 = vmatprep.subr.mxu0 0.0
      %645 = vmatpush1.msra.mxu0 0.0
      %646 = vmatprep.subr.mxu0 0.0
      %647 = vmatpush1.msra.mxu0 0.0
      %648 = vmatprep.subr.mxu0 0.0
      %649 = vmatpush1.msra.mxu0 0.0
      %650 = vmatprep.subr.mxu0 0.0
      %651 = vmatpush1.msra.mxu0 0.0
      %652 = vmatprep.subr.mxu0 0.0
      %653 = vmatpush1.msra.mxu0 0.0
      %654 = vmatprep.subr.mxu0 0.0
      %655 = vmatpush1.msra.mxu0 0.0
      %656 = vmatprep.subr.mxu0 0.0
      %657 = vmatpush1.msra.mxu0 0.0
      %658 = vmatprep.subr.mxu0 0.0
      %659 = vmatpush1.msra.mxu0 0.0
      %660 = vmatprep.subr.mxu0 0.0
      %661 = vmatpush1.msra.mxu0 0.0
      %662 = vmatprep.subr.mxu0 0.0
      %663 = vmatpush1.msra.mxu0 0.0
      %664 = vmatprep.subr.mxu0 0.0
      %665 = vmatpush1.msra.mxu0 0.0
      %666 = vmatprep.subr.mxu0 0.0
      %667 = vmatpush1.msra.mxu0 0.0
      %668 = vmatprep.subr.mxu0 0.0
      %669 = vmatpush1.msra.mxu0 0.0
      %670 = vmatprep.subr.mxu0 0.0
      %671 = vmatpush1.msra.mxu0 0.0
      %672 = vmatprep.subr.mxu0 0.0
      %673 = vmatpush1.msra.mxu0 0.0
      %674 = vmatprep.subr.mxu0 0.0
      %675 = vmatpush1.msra.mxu0 0.0
      %676 = vmatprep.subr.mxu0 0.0
      %677 = vmatpush1.msra.mxu0 0.0
      %678 = vmatprep.subr.mxu0 0.0
      %679 = vmatpush1.msra.mxu0 0.0
      %680 = vmatprep.subr.mxu0 0.0
      %681 = vmatpush1.msra.mxu0 0.0
      %682 = vmatprep.subr.mxu0 0.0
      %683 = vmatpush1.msra.mxu0 0.0
      %684 = vmatprep.subr.mxu0 0.0
      %685 = vmatpush1.msra.mxu0 0.0
      %686 = vmatprep.subr.mxu0 0.0
      %687 = vmatpush1.msra.mxu0 0.0
      %688 = vmatprep.subr.mxu0 0.0
      %689 = vmatpush1.msra.mxu0 0.0
      %690 = vmatprep.mubr.f32.mxu0 0.0
      %691 = vmatmul.mubr.f32.gmra.mrb[0].mxu0 %v264
      %v692 = vpop.f32.mrb[0].mxu0
      %v693 = vadd.f32 0.0, %v692
      %v694 = vpop.f32.mrb[0].mxu0
      %v695 = vadd.f32 0.0, %v694
      %696 = vmatprep.mubr.f32.mxu0 0.0
      %697 = vmatmul.mubr.f32.gmra.mrb[0].mxu0 %v267
      %v698 = vpop.f32.mrb[0].mxu0
      %v699 = vadd.f32 0.0, %v698
      %v700 = vpop.f32.mrb[0].mxu0
      %v701 = vadd.f32 0.0, %v700
      %702 = vdwg.mxu0
      %703 = vmatprep.subr.mxu0 %v193
      %704 = vmatpush1.msra.mxu0 %v192
      %705 = vmatprep.subr.mxu0 %v209
      %706 = vmatpush1.msra.mxu0 %v208
      %707 = vmatprep.subr.mxu0 %v225
      %708 = vmatpush1.msra.mxu0 %v224
      %709 = vmatprep.subr.mxu0 %v241
      %710 = vmatpush1.msra.mxu0 %v240
      %711 = vmatprep.subr.mxu0 %v304
      %712 = vmatpush1.msra.mxu0 %v301
      %713 = vmatprep.subr.mxu0 0.0
      %714 = vmatpush1.msra.mxu0 0.0
      %715 = vmatprep.subr.mxu0 0.0
      %716 = vmatpush1.msra.mxu0 0.0
      %717 = vmatprep.subr.mxu0 0.0
      %718 = vmatpush1.msra.mxu0 0.0
      %719 = vmatprep.subr.mxu0 0.0
      %720 = vmatpush1.msra.mxu0 0.0
      %721 = vmatprep.subr.mxu0 0.0
      %722 = vmatpush1.msra.mxu0 0.0
      %723 = vmatprep.subr.mxu0 0.0
      %724 = vmatpush1.msra.mxu0 0.0
      %725 = vmatprep.subr.mxu0 0.0
      %726 = vmatpush1.msra.mxu0 0.0
      %727 = vmatprep.subr.mxu0 0.0
      %728 = vmatpush1.msra.mxu0 0.0
      %729 = vmatprep.subr.mxu0 0.0
      %730 = vmatpush1.msra.mxu0 0.0
      %731 = vmatprep.subr.mxu0 0.0
      %732 = vmatpush1.msra.mxu0 0.0
      %733 = vmatprep.subr.mxu0 0.0
      %734 = vmatpush1.msra.mxu0 0.0
      %735 = vmatprep.subr.mxu0 0.0
      %736 = vmatpush1.msra.mxu0 0.0
      %737 = vmatprep.subr.mxu0 0.0
      %738 = vmatpush1.msra.mxu0 0.0
      %739 = vmatprep.subr.mxu0 0.0
      %740 = vmatpush1.msra.mxu0 0.0
      %741 = vmatprep.subr.mxu0 0.0
      %742 = vmatpush1.msra.mxu0 0.0
      %743 = vmatprep.subr.mxu0 0.0
      %744 = vmatpush1.msra.mxu0 0.0
      %745 = vmatprep.subr.mxu0 0.0
      %746 = vmatpush1.msra.mxu0 0.0
      %747 = vmatprep.subr.mxu0 0.0
      %748 = vmatpush1.msra.mxu0 0.0
      %749 = vmatprep.subr.mxu0 0.0
      %750 = vmatpush1.msra.mxu0 0.0
      %751 = vmatprep.subr.mxu0 0.0
      %752 = vmatpush1.msra.mxu0 0.0
      %753 = vmatprep.subr.mxu0 0.0
      %754 = vmatpush1.msra.mxu0 0.0
      %755 = vmatprep.subr.mxu0 0.0
      %756 = vmatpush1.msra.mxu0 0.0
      %757 = vmatprep.subr.mxu0 0.0
      %758 = vmatpush1.msra.mxu0 0.0
      %759 = vmatprep.subr.mxu0 0.0
      %760 = vmatpush1.msra.mxu0 0.0
      %761 = vmatprep.subr.mxu0 0.0
      %762 = vmatpush1.msra.mxu0 0.0
      %763 = vmatprep.subr.mxu0 0.0
      %764 = vmatpush1.msra.mxu0 0.0
      %765 = vmatprep.subr.mxu0 0.0
      %766 = vmatpush1.msra.mxu0 0.0
      %767 = vmatprep.mubr.f32.mxu0 0.0
      %768 = vmatmul.mubr.f32.gmra.mrb[0].mxu0 %v264
      %v769 = vpop.f32.mrb[0].mxu0
      %v770 = vadd.f32 0.0, %v769
      %v771 = vpop.f32.mrb[0].mxu0
      %v772 = vadd.f32 0.0, %v771
      %773 = vmatprep.mubr.f32.mxu0 0.0
      %774 = vmatmul.mubr.f32.gmra.mrb[0].mxu0 %v267
      %v775 = vpop.f32.mrb[0].mxu0
      %v776 = vadd.f32 0.0, %v775
      %v777 = vpop.f32.mrb[0].mxu0
      %v778 = vadd.f32 0.0, %v777
      %779 = vdwg.mxu0
      %780 = vmatprep.subr.mxu0 %v195
      %781 = vmatpush1.msra.mxu0 %v194
      %782 = vmatprep.subr.mxu0 %v211
      %783 = vmatpush1.msra.mxu0 %v210
      %784 = vmatprep.subr.mxu0 %v227
      %785 = vmatpush1.msra.mxu0 %v226
      %786 = vmatprep.subr.mxu0 %v243
      %787 = vmatpush1.msra.mxu0 %v242
      %788 = vmatprep.subr.mxu0 %v310
      %789 = vmatpush1.msra.mxu0 %v307
      %790 = vmatprep.subr.mxu0 0.0
      %791 = vmatpush1.msra.mxu0 0.0
      %792 = vmatprep.subr.mxu0 0.0
      %793 = vmatpush1.msra.mxu0 0.0
      %794 = vmatprep.subr.mxu0 0.0
      %795 = vmatpush1.msra.mxu0 0.0
      %796 = vmatprep.subr.mxu0 0.0
      %797 = vmatpush1.msra.mxu0 0.0
      %798 = vmatprep.subr.mxu0 0.0
      %799 = vmatpush1.msra.mxu0 0.0
      %800 = vmatprep.subr.mxu0 0.0
      %801 = vmatpush1.msra.mxu0 0.0
      %802 = vmatprep.subr.mxu0 0.0
      %803 = vmatpush1.msra.mxu0 0.0
      %804 = vmatprep.subr.mxu0 0.0
      %805 = vmatpush1.msra.mxu0 0.0
      %806 = vmatprep.subr.mxu0 0.0
      %807 = vmatpush1.msra.mxu0 0.0
      %808 = vmatprep.subr.mxu0 0.0
      %809 = vmatpush1.msra.mxu0 0.0
      %810 = vmatprep.subr.mxu0 0.0
      %811 = vmatpush1.msra.mxu0 0.0
      %812 = vmatprep.subr.mxu0 0.0
      %813 = vmatpush1.msra.mxu0 0.0
      %814 = vmatprep.subr.mxu0 0.0
      %815 = vmatpush1.msra.mxu0 0.0
      %816 = vmatprep.subr.mxu0 0.0
      %817 = vmatpush1.msra.mxu0 0.0
      %818 = vmatprep.subr.mxu0 0.0
      %819 = vmatpush1.msra.mxu0 0.0
      %820 = vmatprep.subr.mxu0 0.0
      %821 = vmatpush1.msra.mxu0 0.0
      %822 = vmatprep.subr.mxu0 0.0
      %823 = vmatpush1.msra.mxu0 0.0
      %824 = vmatprep.subr.mxu0 0.0
      %825 = vmatpush1.msra.mxu0 0.0
      %826 = vmatprep.subr.mxu0 0.0
      %827 = vmatpush1.msra.mxu0 0.0
      %828 = vmatprep.subr.mxu0 0.0
      %829 = vmatpush1.msra.mxu0 0.0
      %830 = vmatprep.subr.mxu0 0.0
      %831 = vmatpush1.msra.mxu0 0.0
      %832 = vmatprep.subr.mxu0 0.0
      %833 = vmatpush1.msra.mxu0 0.0
      %834 = vmatprep.subr.mxu0 0.0
      %835 = vmatpush1.msra.mxu0 0.0
      %836 = vmatprep.subr.mxu0 0.0
      %837 = vmatpush1.msra.mxu0 0.0
      %838 = vmatprep.subr.mxu0 0.0
      %839 = vmatpush1.msra.mxu0 0.0
      %840 = vmatprep.subr.mxu0 0.0
      %841 = vmatpush1.msra.mxu0 0.0
      %842 = vmatprep.subr.mxu0 0.0
      %843 = vmatpush1.msra.mxu0 0.0
      %844 = vmatprep.mubr.f32.mxu0 0.0
      %845 = vmatmul.mubr.f32.gmra.mrb[0].mxu0 %v264
      %v846 = vpop.f32.mrb[0].mxu0
      %v847 = vadd.f32 0.0, %v846
      %v848 = vpop.f32.mrb[0].mxu0
      %v849 = vadd.f32 0.0, %v848
      %850 = vmatprep.mubr.f32.mxu0 0.0
      %851 = vmatmul.mubr.f32.gmra.mrb[0].mxu0 %v267
      %v852 = vpop.f32.mrb[0].mxu0
      %v853 = vadd.f32 0.0, %v852
      %v854 = vpop.f32.mrb[0].mxu0
      %v855 = vadd.f32 0.0, %v854
      %856 = vdwg.mxu0
      %857 = vmatprep.subr.mxu0 %v197
      %858 = vmatpush1.msra.mxu0 %v196
      %859 = vmatprep.subr.mxu0 %v213
      %860 = vmatpush1.msra.mxu0 %v212
      %861 = vmatprep.subr.mxu0 %v229
      %862 = vmatpush1.msra.mxu0 %v228
      %863 = vmatprep.subr.mxu0 %v245
      %864 = vmatpush1.msra.mxu0 %v244
      %865 = vmatprep.subr.mxu0 %v316
      %866 = vmatpush1.msra.mxu0 %v313
      %867 = vmatprep.subr.mxu0 0.0
      %868 = vmatpush1.msra.mxu0 0.0
      %869 = vmatprep.subr.mxu0 0.0
      %870 = vmatpush1.msra.mxu0 0.0
      %871 = vmatprep.subr.mxu0 0.0
      %872 = vmatpush1.msra.mxu0 0.0
      %873 = vmatprep.subr.mxu0 0.0
      %874 = vmatpush1.msra.mxu0 0.0
      %875 = vmatprep.subr.mxu0 0.0
      %876 = vmatpush1.msra.mxu0 0.0
      %877 = vmatprep.subr.mxu0 0.0
      %878 = vmatpush1.msra.mxu0 0.0
      %879 = vmatprep.subr.mxu0 0.0
      %880 = vmatpush1.msra.mxu0 0.0
      %881 = vmatprep.subr.mxu0 0.0
      %882 = vmatpush1.msra.mxu0 0.0
      %883 = vmatprep.subr.mxu0 0.0
      %884 = vmatpush1.msra.mxu0 0.0
      %885 = vmatprep.subr.mxu0 0.0
      %886 = vmatpush1.msra.mxu0 0.0
      %887 = vmatprep.subr.mxu0 0.0
      %888 = vmatpush1.msra.mxu0 0.0
      %889 = vmatprep.subr.mxu0 0.0
      %890 = vmatpush1.msra.mxu0 0.0
      %891 = vmatprep.subr.mxu0 0.0
      %892 = vmatpush1.msra.mxu0 0.0
      %893 = vmatprep.subr.mxu0 0.0
      %894 = vmatpush1.msra.mxu0 0.0
      %895 = vmatprep.subr.mxu0 0.0
      %896 = vmatpush1.msra.mxu0 0.0
      %897 = vmatprep.subr.mxu0 0.0
      %898 = vmatpush1.msra.mxu0 0.0
      %899 = vmatprep.subr.mxu0 0.0
      %900 = vmatpush1.msra.mxu0 0.0
      %901 = vmatprep.subr.mxu0 0.0
      %902 = vmatpush1.msra.mxu0 0.0
      %903 = vmatprep.subr.mxu0 0.0
      %904 = vmatpush1.msra.mxu0 0.0
      %905 = vmatprep.subr.mxu0 0.0
      %906 = vmatpush1.msra.mxu0 0.0
      %907 = vmatprep.subr.mxu0 0.0
      %908 = vmatpush1.msra.mxu0 0.0
      %909 = vmatprep.subr.mxu0 0.0
      %910 = vmatpush1.msra.mxu0 0.0
      %911 = vmatprep.subr.mxu0 0.0
      %912 = vmatpush1.msra.mxu0 0.0
      %913 = vmatprep.subr.mxu0 0.0
      %914 = vmatpush1.msra.mxu0 0.0
      %915 = vmatprep.subr.mxu0 0.0
      %916 = vmatpush1.msra.mxu0 0.0
      %917 = vmatprep.subr.mxu0 0.0
      %918 = vmatpush1.msra.mxu0 0.0
      %919 = vmatprep.subr.mxu0 0.0
      %920 = vmatpush1.msra.mxu0 0.0
      %921 = vmatprep.mubr.f32.mxu0 0.0
      %922 = vmatmul.mubr.f32.gmra.mrb[0].mxu0 %v264
      %v923 = vpop.f32.mrb[0].mxu0
      %v924 = vadd.f32 0.0, %v923
      %v925 = vpop.f32.mrb[0].mxu0
      %v926 = vadd.f32 0.0, %v925
      %927 = vmatprep.mubr.f32.mxu0 0.0
      %928 = vmatmul.mubr.f32.gmra.mrb[0].mxu0 %v267
      %v929 = vpop.f32.mrb[0].mxu0
      %v930 = vadd.f32 0.0, %v929
      %v931 = vpop.f32.mrb[0].mxu0
      %v932 = vadd.f32 0.0, %v931
      %933 = vdwg.mxu0
      %v934 = vmax.f32 %v385, %v387
      %v935 = vmax.f32 %v391, %v393
      %v936 = vmax.f32 %v462, %v464
      %v937 = vmax.f32 %v468, %v470
      %v938 = vmax.f32 %v539, %v541
      %v939 = vmax.f32 %v545, %v547
      %v940 = vmax.f32 %v616, %v618
      %v941 = vmax.f32 %v622, %v624
      %v942 = vmax.f32 %v693, %v695
      %v943 = vmax.f32 %v699, %v701
      %v944 = vmax.f32 %v770, %v772
      %v945 = vmax.f32 %v776, %v778
      %v946 = vmax.f32 %v847, %v849
      %v947 = vmax.f32 %v853, %v855
      %v948 = vmax.f32 %v924, %v926
      %v949 = vmax.f32 %v930, %v932
      %v950 = vmax.f32 %v934, %v936
      %v951 = vmax.f32 %v935, %v937
      %v952 = vmax.f32 %v938, %v940
      %v953 = vmax.f32 %v939, %v941
      %v954 = vmax.f32 %v942, %v944
      %v955 = vmax.f32 %v943, %v945
      %v956 = vmax.f32 %v946, %v948
      %v957 = vmax.f32 %v947, %v949
      %v958 = vmax.f32 %v950, %v952
      %v959 = vmax.f32 %v951, %v953
      %v960 = vmax.f32 %v954, %v956
      %v961 = vmax.f32 %v955, %v957
      %v962 = vmax.f32 %v958, %v960
      %v963 = vmax.f32 %v959, %v961
      %v964 = vxor.u32 %v962, 2147483648
      %v965 = vmul.f32 %v964, 1.442695
      %v966 = vpow.pop %v965
      %v967 = vadd.f32 %v966, 1.0
      %v968 = vrcp.pop %v967
      %v969 = vmul.f32 1.0, %v968
      %970 = vst [vmem:[%s175] sm:$0xff] %v969
      %v971 = vmax.f32 %v963, 0.0
      %972 = vst [vmem:[%s179] sm:$0xff] %v971
      %p973 = scmp.lt.s32.totalorder %s15, 1
      %s974 = scalar_select %p973, %s15, 1
      %s975 = smul.addr %s974, 8
      %s976 = scalar_lea.vmem %s2, %s975
      %p977 = scmp.lt.s32.totalorder %s15, 1
      %s978 = scalar_select %p977, %s15, 1
      %s979 = smul.addr %s978, 8
      %s980 = scalar_lea.vmem %s3, %s979
      // Predicated region
      $region29: #{flow_process.2} parent=27 // pred_check
        %p981 = pneg %p80
      $region30: #{flow_process.2} parent=27 // pred_check_branch
        %983 = sbr.rel (%p981) target = $region32
      $region31: #{flow_process.2} parent=27 // pred_region
        _
      $region32: #{flow_process.2} parent=27 // pred_fallthru
        _
      // Predicated region
      $region33: #{flow_process.2} parent=27 // pred_check
        %p984 = pneg %p106
      $region34: #{flow_process.2} parent=27 // pred_check_branch
        %986 = sbr.rel (%p984) target = $region36
      $region35: #{flow_process.2} parent=27 // pred_region
        _
      $region36: #{flow_process.2} parent=27 // pred_fallthru
        _
    $region28: #{flow_process.2} parent=5 // pred_fallthru
      _
    %p987 = scmp.le.s32.totalorder 2, %s10
    // Predicated region
    $region37: #{flow_process.2} parent=5 // pred_check
      %p988 = pneg %p987
    $region38: #{flow_process.2} parent=5 // pred_check_branch
      %990 = sbr.rel (%p988) target = $region40
    $region39: #{flow_process.2} parent=5 // pred_region
      %s991 = ssub.s32 %s10, 2
      // Predicated region
      $region41: #{flow_process.2} parent=39 // pred_check
        %p992 = pneg %p86
      $region42: #{flow_process.2} parent=39 // pred_check_branch
        %994 = sbr.rel (%p992) target = $region44
      $region43: #{flow_process.2} parent=39 // pred_region
        %p995 = scmp.lt.s32.totalorder %s16, 1
        %s996 = scalar_select %p995, %s16, 1
        %s997 = smul.addr %s996, 8
        %s998 = scalar_lea.vmem %s2, %s997
      $region44: #{flow_process.2} parent=39 // pred_fallthru
        _
      // Predicated region
      $region45: #{flow_process.2} parent=39 // pred_check
        %p999 = pneg %p112
      $region46: #{flow_process.2} parent=39 // pred_check_branch
        %1001 = sbr.rel (%p999) target = $region48
      $region47: #{flow_process.2} parent=39 // pred_region
        %p1002 = scmp.lt.s32.totalorder %s16, 1
        %s1003 = scalar_select %p1002, %s16, 1
        %s1004 = smul.addr %s1003, 8
        %s1005 = scalar_lea.vmem %s3, %s1004
      $region48: #{flow_process.2} parent=39 // pred_fallthru
        _
    $region40: #{flow_process.2} parent=5 // pred_fallthru
      _
  $region6: #{flow_process.2} parent=0 // loop_footer
    %s14 = sadd.s32 1, %s10
  $region7: #{flow_process.2} parent=0 // loop_footer_branch
    %9 = sbr.rel target = $region3
  $region8: #{flow_process.2} parent=0 // loop_exit
    _

</llo_original>
